<compile_context>
chip_gen: v5e
topology: v5e:2x2
jax: 0.10.0
libtpu: 0.0.40
codegen_flags: <defaults>
</compile_context>

<pallas_src>
import functools

import jax
import jax.numpy as jnp
from jax.experimental import pallas as pl
from jax.experimental.pallas import tpu as pltpu


def _round_up(n, m):
    return (n + m - 1) // m * m


# ----------------------------------------------------------------------------
# Fused whole-model kernel: 7 banded-conv matmuls + FC head, all on the MXU.
# ----------------------------------------------------------------------------
def adnn_kernel(x_ref, *rest, n_layers, leaky):
    """One grid step processes TILE_M samples.

    x_ref : (TILE_M, L)                 raw input rows (f32)
    rest  : per conv block i: wband_i (Fin_i, Fout_i)  bf16 banded conv+BN-scale
                              shift_i (1, Fout_i)      f32  folded-BN shift
            then wfcT (F_last, n_classes) bf16, bfc (1, n_classes) f32,
            and out_ref (TILE_M, n_classes).
    """
    out_ref = rest[-1]

    h = x_ref[...].astype(jnp.float32)                       # (TILE_M, L)
    for i in range(n_layers):
        w = rest[2 * i][...]                                  # (Fin, Fout) bf16
        shift = rest[2 * i + 1][...]                          # (1, Fout)   f32
        y = jnp.dot(h.astype(jnp.bfloat16), w,
                    preferred_element_type=jnp.float32)       # MXU
        y = y + shift                                         # folded BN shift (VPU, f32)
        if leaky[i]:
            h = jnp.where(y > 0.0, y, 0.01 * y)               # LeakyReLU(0.01)
        else:
            h = jnp.maximum(y, 0.0)                           # ReLU

    wfc = rest[2 * n_layers][...]                             # (F_last, n_cls) bf16
    bfc = rest[2 * n_layers + 1][...]                         # (1, n_cls)      f32
    out = jnp.dot(h.astype(jnp.bfloat16), wfc,
                  preferred_element_type=jnp.float32) + bfc   # Flatten+Linear head
    out_ref[...] = out.astype(out_ref.dtype)


# ----------------------------------------------------------------------------
# Trace-time parameter re-layout: Conv1d(k=5,"same") + BN scale -> band matrix
# ----------------------------------------------------------------------------
def _conv_bn_to_band(w, gamma, beta, mean, var, L, eps=1e-5):
    """w: (Cout, Cin, 5) torch layout -> (Cin*L, Cout*L) band matrix + shift."""
    cout, cin, K = w.shape
    scale = gamma / jnp.sqrt(var + eps)
    shift = beta - scale * mean                               # conv bias = False

    p = jnp.arange(L)                                         # input position
    l = jnp.arange(L)                                         # output position
    k = p[:, None] - l[None, :] + (K // 2)                    # tap index (L_in, L_out)
    valid = (k >= 0) & (k < K)
    kc = jnp.clip(k, 0, K - 1)

    gath = w[:, :, kc]                                        # (Cout, Cin, L_in, L_out)
    gath = jnp.where(valid[None, None], gath, 0.0)            # zero "same" padding
    gath = gath * scale[:, None, None, None]                  # fold BN scale
    wband = jnp.transpose(gath, (1, 2, 0, 3)).reshape(cin * L, cout * L)
    shift_lane = jnp.repeat(shift, L).reshape(1, cout * L)    # shift per output lane
    return wband, shift_lane


# ----------------------------------------------------------------------------
# Wrapper: one pallas_call with a grid over the sample axis.
# ----------------------------------------------------------------------------
def adnn_forward(x, params, *, leaky, tile_m=None):
    """x: (B, T, input_size) -> (B, T, n_classes). One Pallas kernel call."""
    B, T, L = x.shape
    M = B * T
    n_layers = len(params["convs"])
    n_classes = params["fc_w"].shape[0]

    # Tile over samples; 8-sublane aligned, up to 256 rows per step in prod.
    if tile_m is None:
        tile_m = min(256, _round_up(M, 8))
    tile_m = max(8, _round_up(tile_m, 8))
    m_pad = _round_up(M, tile_m)

    xf = x.reshape(M, L).astype(jnp.float32)
    if m_pad != M:
        xf = jnp.pad(xf, ((0, m_pad - M), (0, 0)))

    args = [xf]
    in_specs = [pl.BlockSpec((tile_m, L), lambda i: (i, 0))]

    def full_spec(shape):
        return pl.BlockSpec(shape, lambda i: (0, 0))          # VMEM-resident weights

    for layer in params["convs"]:
        wband, shift = _conv_bn_to_band(layer["w"], layer["gamma"], layer["beta"],
                                        layer["mean"], layer["var"], L)
        wband = wband.astype(jnp.bfloat16)                    # MXU operand in bf16
        args += [wband, shift.astype(jnp.float32)]
        in_specs += [full_spec(wband.shape), full_spec(shift.shape)]

    wfcT = params["fc_w"].T.astype(jnp.bfloat16)              # (C_last*L, n_classes)
    bfc = params["fc_b"].reshape(1, n_classes).astype(jnp.float32)
    args += [wfcT, bfc]
    in_specs += [full_spec(wfcT.shape), full_spec(bfc.shape)]

    # Tile-derived VMEM budget (weights double-buffered + activations + i/o).
    weight_bytes = sum(int(a.size) * a.dtype.itemsize for a in args[1:])
    max_f = max(int(a.shape[-1]) for a in args[1:])
    act_bytes = 4 * tile_m * max_f * 4
    io_bytes = 2 * tile_m * (L + n_classes) * 4
    vmem_limit = int(min(48 << 20, max(16 << 20, 2 * (weight_bytes + act_bytes + io_bytes))))

    matmul_flops = 2 * m_pad * (
        sum(int(a.shape[0]) * int(a.shape[1]) for a in args[1::2]))
    cost = pl.CostEstimate(
        flops=int(matmul_flops), transcendentals=0,
        bytes_accessed=int(xf.size * 4 + weight_bytes + m_pad * n_classes * 4))

    kernel = functools.partial(adnn_kernel, n_layers=n_layers, leaky=tuple(leaky))
    out = pl.pallas_call(
        kernel,
        out_shape=jax.ShapeDtypeStruct((m_pad, n_classes), jnp.float32),
        grid=(m_pad // tile_m,),
        in_specs=in_specs,
        out_specs=pl.BlockSpec((tile_m, n_classes), lambda i: (i, 0)),
        compiler_params=pltpu.CompilerParams(
            dimension_semantics=("parallel",),
            vmem_limit_bytes=vmem_limit),
        cost_estimate=cost,
    )(*args)

    return out[:M].reshape(B, T, n_classes)


# ----------------------------------------------------------------------------
# Deterministic parameter initialization (matches ADNN structure)
# ----------------------------------------------------------------------------
def init_params(key, input_size, dim, n_classes):
    specs = [(1, dim // 8), (dim // 8, dim // 4), (dim // 4, dim // 2),       # encoder
             (dim // 2, dim), (dim, dim // 2), (dim // 2, dim // 4),          # decoder
             (dim // 4, dim // 8)]
    n_encoder = 3
    keys = jax.random.split(key, len(specs) + 1)
    convs = []
    for i, (cin, cout) in enumerate(specs):
        k1, k2, k3 = jax.random.split(keys[i], 3)
        convs.append(dict(
            w=jax.random.normal(k1, (cout, cin, 5), jnp.float32) / jnp.sqrt(5.0 * cin),
            gamma=1.0 + 0.1 * jax.random.normal(k2, (cout,), jnp.float32),
            beta=0.1 * jax.random.normal(k3, (cout,), jnp.float32),
            mean=jnp.zeros((cout,), jnp.float32),
            var=jnp.ones((cout,), jnp.float32),
        ))
    kf1, kf2 = jax.random.split(keys[-1])
    feat = (dim // 8) * input_size
    params = dict(
        convs=convs,
        fc_w=jax.random.normal(kf1, (n_classes, feat), jnp.float32) / jnp.sqrt(float(feat)),
        fc_b=0.01 * jax.random.normal(kf2, (n_classes,), jnp.float32),
    )
    leaky = tuple(i >= n_encoder for i in range(len(specs)))  # ReLU x3, LeakyReLU x4
    return params, leaky


# ----------------------------------------------------------------------------
# Pure-JAX reference of the PyTorch forward (for correctness check)
# ----------------------------------------------------------------------------
def adnn_reference(x, params, leaky):
    prec = jax.lax.Precision.HIGHEST
    B, T, L = x.shape
    eps = 1e-5
    h = x.reshape(B * T, 1, L).astype(jnp.float32)            # (M, Cin, L)
    for i, layer in enumerate(params["convs"]):
        w = layer["w"]                                        # (Cout, Cin, 5)
        h_pad = jnp.pad(h, ((0, 0), (0, 0), (2, 2)))
        y = 0.0
        for k in range(5):
            y = y + jnp.einsum("oi,mil->mol", w[:, :, k], h_pad[:, :, k:k + L],
                               precision=prec)
        scale = layer["gamma"] / jnp.sqrt(layer["var"] + eps)
        shift = layer["beta"] - scale * layer["mean"]
        y = y * scale[None, :, None] + shift[None, :, None]
        h = jnp.where(y > 0.0, y, 0.01 * y) if leaky[i] else jnp.maximum(y, 0.0)
    flat = h.reshape(B * T, -1)                               # channel-major flatten
    out = jnp.einsum("mf,nf->mn", flat, params["fc_w"], precision=prec) + params["fc_b"]
    return out.reshape(B, T, -1)


# ----------------------------------------------------------------------------
if __name__ == "__main__":
    key = jax.random.PRNGKey(0)
    kx, kp = jax.random.split(key)

    B, T = 2, 8                 # batch, transmission_length  -> M = 16 samples
    INPUT_SIZE = 16             # conv length
    DIM = 32                    # channels 4 / 8 / 16 / 32
    N_CLASSES = 4

    x = jax.random.normal(kx, (B, T, INPUT_SIZE), jnp.float32)
    params, leaky = init_params(kp, INPUT_SIZE, DIM, N_CLASSES)

    # tile_m=8 -> grid=(2,) exercises the sample-axis pipeline on this demo.
    fwd = jax.jit(functools.partial(adnn_forward, leaky=leaky, tile_m=8))
    out = jax.block_until_ready(fwd(x, params))

    assert out.shape == (B, T, N_CLASSES), out.shape
    assert out.dtype == jnp.float32
    assert bool(jnp.all(jnp.isfinite(out)))

    # Verify against a pure-JAX f32 reference of the PyTorch forward
    # (kernel uses bf16 MXU operands, hence the relative tolerance).
    ref = adnn_reference(x, params, leaky)
    err = float(jnp.max(jnp.abs(out - ref)))
    tol = 5e-2 * float(jnp.max(jnp.abs(ref))) + 1e-2
    assert err <= tol, (err, tol)

    print("KERNEL_OK")
</pallas_src>

<mosaic_0001>
module attributes {stable_mosaic.version = 11 : i64} {
  func.func @adnn_kernel(%arg0: i32, %arg1: memref<8x16xf32, #tpu.memory_space<vmem>>, %arg2: memref<16x64xbf16, #tpu.memory_space<vmem>>, %arg3: memref<1x64xf32, #tpu.memory_space<vmem>>, %arg4: memref<64x128xbf16, #tpu.memory_space<vmem>>, %arg5: memref<1x128xf32, #tpu.memory_space<vmem>>, %arg6: memref<128x256xbf16, #tpu.memory_space<vmem>>, %arg7: memref<1x256xf32, #tpu.memory_space<vmem>>, %arg8: memref<256x512xbf16, #tpu.memory_space<vmem>>, %arg9: memref<1x512xf32, #tpu.memory_space<vmem>>, %arg10: memref<512x256xbf16, #tpu.memory_space<vmem>>, %arg11: memref<1x256xf32, #tpu.memory_space<vmem>>, %arg12: memref<256x128xbf16, #tpu.memory_space<vmem>>, %arg13: memref<1x128xf32, #tpu.memory_space<vmem>>, %arg14: memref<128x64xbf16, #tpu.memory_space<vmem>>, %arg15: memref<1x64xf32, #tpu.memory_space<vmem>>, %arg16: memref<64x4xbf16, #tpu.memory_space<vmem>>, %arg17: memref<1x4xf32, #tpu.memory_space<vmem>>, %arg18: memref<8x4xf32, #tpu.memory_space<vmem>>) attributes {dimension_semantics = [#tpu.dimension_semantics<parallel>], iteration_bounds = array<i64: 2>, scalar_prefetch = 0 : i64, scratch_operands = 0 : i64, tpu.core_type = #tpu.core_type<tc>, window_params = [{transform_indices = @transform_0, window_bounds = array<i64: 8, 16>}, {pipeline_mode = #tpu.pipeline_mode<synchronous>, transform_indices = @transform_1, window_bounds = array<i64: 16, 64>}, {pipeline_mode = #tpu.pipeline_mode<synchronous>, transform_indices = @transform_2, window_bounds = array<i64: 1, 64>}, {pipeline_mode = #tpu.pipeline_mode<synchronous>, transform_indices = @transform_3, window_bounds = array<i64: 64, 128>}, {pipeline_mode = #tpu.pipeline_mode<synchronous>, transform_indices = @transform_4, window_bounds = array<i64: 1, 128>}, {pipeline_mode = #tpu.pipeline_mode<synchronous>, transform_indices = @transform_5, window_bounds = array<i64: 128, 256>}, {pipeline_mode = #tpu.pipeline_mode<synchronous>, transform_indices = @transform_6, window_bounds = array<i64: 1, 256>}, {pipeline_mode = #tpu.pipeline_mode<synchronous>, transform_indices = @transform_7, window_bounds = array<i64: 256, 512>}, {pipeline_mode = #tpu.pipeline_mode<synchronous>, transform_indices = @transform_8, window_bounds = array<i64: 1, 512>}, {pipeline_mode = #tpu.pipeline_mode<synchronous>, transform_indices = @transform_9, window_bounds = array<i64: 512, 256>}, {pipeline_mode = #tpu.pipeline_mode<synchronous>, transform_indices = @transform_10, window_bounds = array<i64: 1, 256>}, {pipeline_mode = #tpu.pipeline_mode<synchronous>, transform_indices = @transform_11, window_bounds = array<i64: 256, 128>}, {pipeline_mode = #tpu.pipeline_mode<synchronous>, transform_indices = @transform_12, window_bounds = array<i64: 1, 128>}, {pipeline_mode = #tpu.pipeline_mode<synchronous>, transform_indices = @transform_13, window_bounds = array<i64: 128, 64>}, {pipeline_mode = #tpu.pipeline_mode<synchronous>, transform_indices = @transform_14, window_bounds = array<i64: 1, 64>}, {pipeline_mode = #tpu.pipeline_mode<synchronous>, transform_indices = @transform_15, window_bounds = array<i64: 64, 4>}, {pipeline_mode = #tpu.pipeline_mode<synchronous>, transform_indices = @transform_16, window_bounds = array<i64: 1, 4>}, {transform_indices = @transform_17, window_bounds = array<i64: 8, 4>}]} {
    %c0 = arith.constant 0 : index
    %c0_0 = arith.constant 0 : index
    %0 = vector.load %arg1[%c0, %c0_0] : memref<8x16xf32, #tpu.memory_space<vmem>>, vector<8x16xf32>
    %c0_1 = arith.constant 0 : index
    %c0_2 = arith.constant 0 : index
    %1 = vector.load %arg2[%c0_1, %c0_2] : memref<16x64xbf16, #tpu.memory_space<vmem>>, vector<16x64xbf16>
    %c0_3 = arith.constant 0 : index
    %c0_4 = arith.constant 0 : index
    %2 = vector.load %arg3[%c0_3, %c0_4] : memref<1x64xf32, #tpu.memory_space<vmem>>, vector<1x64xf32>
    %3 = arith.truncf %0 : vector<8x16xf32> to vector<8x16xbf16>
    %cst = arith.constant dense<0.000000e+00> : vector<8x64xf32>
    %4 = tpu.matmul %3, %1, %cst {dimension_numbers = #tpu.dot_dimension_numbers<[1], [0], [0], [1], [0, 0, 1, 1], [], []>} : vector<8x16xbf16>, vector<16x64xbf16>, vector<8x64xf32> -> vector<8x64xf32>
    %5 = vector.broadcast %2 : vector<1x64xf32> to vector<8x64xf32>
    %6 = arith.addf %4, %5 : vector<8x64xf32>
    %cst_5 = arith.constant 0.000000e+00 : f32
    %7 = vector.broadcast %cst_5 : f32 to vector<8x64xf32>
    %8 = arith.maximumf %6, %7 : vector<8x64xf32>
    %c0_6 = arith.constant 0 : index
    %c0_7 = arith.constant 0 : index
    %9 = vector.load %arg4[%c0_6, %c0_7] : memref<64x128xbf16, #tpu.memory_space<vmem>>, vector<64x128xbf16>
    %c0_8 = arith.constant 0 : index
    %c0_9 = arith.constant 0 : index
    %10 = vector.load %arg5[%c0_8, %c0_9] : memref<1x128xf32, #tpu.memory_space<vmem>>, vector<1x128xf32>
    %11 = arith.truncf %8 : vector<8x64xf32> to vector<8x64xbf16>
    %cst_10 = arith.constant dense<0.000000e+00> : vector<8x128xf32>
    %12 = tpu.matmul %11, %9, %cst_10 {dimension_numbers = #tpu.dot_dimension_numbers<[1], [0], [0], [1], [0, 0, 1, 1], [], []>} : vector<8x64xbf16>, vector<64x128xbf16>, vector<8x128xf32> -> vector<8x128xf32>
    %13 = vector.broadcast %10 : vector<1x128xf32> to vector<8x128xf32>
    %14 = arith.addf %12, %13 : vector<8x128xf32>
    %cst_11 = arith.constant 0.000000e+00 : f32
    %15 = vector.broadcast %cst_11 : f32 to vector<8x128xf32>
    %16 = arith.maximumf %14, %15 : vector<8x128xf32>
    %c0_12 = arith.constant 0 : index
    %c0_13 = arith.constant 0 : index
    %17 = vector.load %arg6[%c0_12, %c0_13] : memref<128x256xbf16, #tpu.memory_space<vmem>>, vector<128x256xbf16>
    %c0_14 = arith.constant 0 : index
    %c0_15 = arith.constant 0 : index
    %18 = vector.load %arg7[%c0_14, %c0_15] : memref<1x256xf32, #tpu.memory_space<vmem>>, vector<1x256xf32>
    %19 = arith.truncf %16 : vector<8x128xf32> to vector<8x128xbf16>
    %cst_16 = arith.constant dense<0.000000e+00> : vector<8x256xf32>
    %20 = tpu.matmul %19, %17, %cst_16 {dimension_numbers = #tpu.dot_dimension_numbers<[1], [0], [0], [1], [0, 0, 1, 1], [], []>} : vector<8x128xbf16>, vector<128x256xbf16>, vector<8x256xf32> -> vector<8x256xf32>
    %21 = vector.broadcast %18 : vector<1x256xf32> to vector<8x256xf32>
    %22 = arith.addf %20, %21 : vector<8x256xf32>
    %cst_17 = arith.constant 0.000000e+00 : f32
    %23 = vector.broadcast %cst_17 : f32 to vector<8x256xf32>
    %24 = arith.maximumf %22, %23 : vector<8x256xf32>
    %c0_18 = arith.constant 0 : index
    %c0_19 = arith.constant 0 : index
    %25 = vector.load %arg8[%c0_18, %c0_19] : memref<256x512xbf16, #tpu.memory_space<vmem>>, vector<256x512xbf16>
    %c0_20 = arith.constant 0 : index
    %c0_21 = arith.constant 0 : index
    %26 = vector.load %arg9[%c0_20, %c0_21] : memref<1x512xf32, #tpu.memory_space<vmem>>, vector<1x512xf32>
    %27 = arith.truncf %24 : vector<8x256xf32> to vector<8x256xbf16>
    %cst_22 = arith.constant dense<0.000000e+00> : vector<8x512xf32>
    %28 = tpu.matmul %27, %25, %cst_22 {dimension_numbers = #tpu.dot_dimension_numbers<[1], [0], [0], [1], [0, 0, 1, 1], [], []>} : vector<8x256xbf16>, vector<256x512xbf16>, vector<8x512xf32> -> vector<8x512xf32>
    %29 = vector.broadcast %26 : vector<1x512xf32> to vector<8x512xf32>
    %30 = arith.addf %28, %29 : vector<8x512xf32>
    %cst_23 = arith.constant 0.000000e+00 : f32
    %31 = vector.broadcast %cst_23 : f32 to vector<8x512xf32>
    %32 = arith.cmpf ogt, %30, %31 : vector<8x512xf32>
    %cst_24 = arith.constant 0.00999999977 : f32
    %33 = vector.broadcast %cst_24 : f32 to vector<8x512xf32>
    %34 = arith.mulf %33, %30 : vector<8x512xf32>
    %35 = arith.select %32, %30, %34 : vector<8x512xi1>, vector<8x512xf32>
    %c0_25 = arith.constant 0 : index
    %c0_26 = arith.constant 0 : index
    %36 = vector.load %arg10[%c0_25, %c0_26] : memref<512x256xbf16, #tpu.memory_space<vmem>>, vector<512x256xbf16>
    %c0_27 = arith.constant 0 : index
    %c0_28 = arith.constant 0 : index
    %37 = vector.load %arg11[%c0_27, %c0_28] : memref<1x256xf32, #tpu.memory_space<vmem>>, vector<1x256xf32>
    %38 = arith.truncf %35 : vector<8x512xf32> to vector<8x512xbf16>
    %cst_29 = arith.constant dense<0.000000e+00> : vector<8x256xf32>
    %39 = tpu.matmul %38, %36, %cst_29 {dimension_numbers = #tpu.dot_dimension_numbers<[1], [0], [0], [1], [0, 0, 1, 1], [], []>} : vector<8x512xbf16>, vector<512x256xbf16>, vector<8x256xf32> -> vector<8x256xf32>
    %40 = vector.broadcast %37 : vector<1x256xf32> to vector<8x256xf32>
    %41 = arith.addf %39, %40 : vector<8x256xf32>
    %cst_30 = arith.constant 0.000000e+00 : f32
    %42 = vector.broadcast %cst_30 : f32 to vector<8x256xf32>
    %43 = arith.cmpf ogt, %41, %42 : vector<8x256xf32>
    %cst_31 = arith.constant 0.00999999977 : f32
    %44 = vector.broadcast %cst_31 : f32 to vector<8x256xf32>
    %45 = arith.mulf %44, %41 : vector<8x256xf32>
    %46 = arith.select %43, %41, %45 : vector<8x256xi1>, vector<8x256xf32>
    %c0_32 = arith.constant 0 : index
    %c0_33 = arith.constant 0 : index
    %47 = vector.load %arg12[%c0_32, %c0_33] : memref<256x128xbf16, #tpu.memory_space<vmem>>, vector<256x128xbf16>
    %c0_34 = arith.constant 0 : index
    %c0_35 = arith.constant 0 : index
    %48 = vector.load %arg13[%c0_34, %c0_35] : memref<1x128xf32, #tpu.memory_space<vmem>>, vector<1x128xf32>
    %49 = arith.truncf %46 : vector<8x256xf32> to vector<8x256xbf16>
    %cst_36 = arith.constant dense<0.000000e+00> : vector<8x128xf32>
    %50 = tpu.matmul %49, %47, %cst_36 {dimension_numbers = #tpu.dot_dimension_numbers<[1], [0], [0], [1], [0, 0, 1, 1], [], []>} : vector<8x256xbf16>, vector<256x128xbf16>, vector<8x128xf32> -> vector<8x128xf32>
    %51 = vector.broadcast %48 : vector<1x128xf32> to vector<8x128xf32>
    %52 = arith.addf %50, %51 : vector<8x128xf32>
    %cst_37 = arith.constant 0.000000e+00 : f32
    %53 = vector.broadcast %cst_37 : f32 to vector<8x128xf32>
    %54 = arith.cmpf ogt, %52, %53 : vector<8x128xf32>
    %cst_38 = arith.constant 0.00999999977 : f32
    %55 = vector.broadcast %cst_38 : f32 to vector<8x128xf32>
    %56 = arith.mulf %55, %52 : vector<8x128xf32>
    %57 = arith.select %54, %52, %56 : vector<8x128xi1>, vector<8x128xf32>
    %c0_39 = arith.constant 0 : index
    %c0_40 = arith.constant 0 : index
    %58 = vector.load %arg14[%c0_39, %c0_40] : memref<128x64xbf16, #tpu.memory_space<vmem>>, vector<128x64xbf16>
    %c0_41 = arith.constant 0 : index
    %c0_42 = arith.constant 0 : index
    %59 = vector.load %arg15[%c0_41, %c0_42] : memref<1x64xf32, #tpu.memory_space<vmem>>, vector<1x64xf32>
    %60 = arith.truncf %57 : vector<8x128xf32> to vector<8x128xbf16>
    %cst_43 = arith.constant dense<0.000000e+00> : vector<8x64xf32>
    %61 = tpu.matmul %60, %58, %cst_43 {dimension_numbers = #tpu.dot_dimension_numbers<[1], [0], [0], [1], [0, 0, 1, 1], [], []>} : vector<8x128xbf16>, vector<128x64xbf16>, vector<8x64xf32> -> vector<8x64xf32>
    %62 = vector.broadcast %59 : vector<1x64xf32> to vector<8x64xf32>
    %63 = arith.addf %61, %62 : vector<8x64xf32>
    %cst_44 = arith.constant 0.000000e+00 : f32
    %64 = vector.broadcast %cst_44 : f32 to vector<8x64xf32>
    %65 = arith.cmpf ogt, %63, %64 : vector<8x64xf32>
    %cst_45 = arith.constant 0.00999999977 : f32
    %66 = vector.broadcast %cst_45 : f32 to vector<8x64xf32>
    %67 = arith.mulf %66, %63 : vector<8x64xf32>
    %68 = arith.select %65, %63, %67 : vector<8x64xi1>, vector<8x64xf32>
    %c0_46 = arith.constant 0 : index
    %c0_47 = arith.constant 0 : index
    %69 = vector.load %arg16[%c0_46, %c0_47] : memref<64x4xbf16, #tpu.memory_space<vmem>>, vector<64x4xbf16>
    %c0_48 = arith.constant 0 : index
    %c0_49 = arith.constant 0 : index
    %70 = vector.load %arg17[%c0_48, %c0_49] : memref<1x4xf32, #tpu.memory_space<vmem>>, vector<1x4xf32>
    %71 = arith.truncf %68 : vector<8x64xf32> to vector<8x64xbf16>
    %cst_50 = arith.constant dense<0.000000e+00> : vector<8x4xf32>
    %72 = tpu.matmul %71, %69, %cst_50 {dimension_numbers = #tpu.dot_dimension_numbers<[1], [0], [0], [1], [0, 0, 1, 1], [], []>} : vector<8x64xbf16>, vector<64x4xbf16>, vector<8x4xf32> -> vector<8x4xf32>
    %73 = vector.broadcast %70 : vector<1x4xf32> to vector<8x4xf32>
    %74 = arith.addf %72, %73 : vector<8x4xf32>
    %c0_51 = arith.constant 0 : index
    %c0_52 = arith.constant 0 : index
    %75 = vector.load %arg18[%c0_51, %c0_52] : memref<8x4xf32, #tpu.memory_space<vmem>>, vector<8x4xf32>
    tpu.vector_store %arg18[%c0_51, %c0_52], %74 {strides = array<i32>} : memref<8x4xf32, #tpu.memory_space<vmem>>, vector<8x4xf32>,
    return
  }
  func.func @transform_0(%arg0: i32) -> (i32, i32) {
    %c0_i32 = arith.constant 0 : i32
    %c0_i32_0 = arith.constant 0 : i32
    return %arg0, %c0_i32 : i32, i32
  }
  func.func @transform_1(%arg0: i32) -> (i32, i32) {
    %c0_i32 = arith.constant 0 : i32
    %c0_i32_0 = arith.constant 0 : i32
    %c0_i32_1 = arith.constant 0 : i32
    return %c0_i32, %c0_i32_0 : i32, i32
  }
  func.func @transform_2(%arg0: i32) -> (i32, i32) {
    %c0_i32 = arith.constant 0 : i32
    %c0_i32_0 = arith.constant 0 : i32
    %c0_i32_1 = arith.constant 0 : i32
    return %c0_i32, %c0_i32_0 : i32, i32
  }
  func.func @transform_3(%arg0: i32) -> (i32, i32) {
    %c0_i32 = arith.constant 0 : i32
    %c0_i32_0 = arith.constant 0 : i32
    %c0_i32_1 = arith.constant 0 : i32
    return %c0_i32, %c0_i32_0 : i32, i32
  }
  func.func @transform_4(%arg0: i32) -> (i32, i32) {
    %c0_i32 = arith.constant 0 : i32
    %c0_i32_0 = arith.constant 0 : i32
    %c0_i32_1 = arith.constant 0 : i32
    return %c0_i32, %c0_i32_0 : i32, i32
  }
  func.func @transform_5(%arg0: i32) -> (i32, i32) {
    %c0_i32 = arith.constant 0 : i32
    %c0_i32_0 = arith.constant 0 : i32
    %c0_i32_1 = arith.constant 0 : i32
    return %c0_i32, %c0_i32_0 : i32, i32
  }
  func.func @transform_6(%arg0: i32) -> (i32, i32) {
    %c0_i32 = arith.constant 0 : i32
    %c0_i32_0 = arith.constant 0 : i32
    %c0_i32_1 = arith.constant 0 : i32
    return %c0_i32, %c0_i32_0 : i32, i32
  }
  func.func @transform_7(%arg0: i32) -> (i32, i32) {
    %c0_i32 = arith.constant 0 : i32
    %c0_i32_0 = arith.constant 0 : i32
    %c0_i32_1 = arith.constant 0 : i32
    return %c0_i32, %c0_i32_0 : i32, i32
  }
  func.func @transform_8(%arg0: i32) -> (i32, i32) {
    %c0_i32 = arith.constant 0 : i32
    %c0_i32_0 = arith.constant 0 : i32
    %c0_i32_1 = arith.constant 0 : i32
    return %c0_i32, %c0_i32_0 : i32, i32
  }
  func.func @transform_9(%arg0: i32) -> (i32, i32) {
    %c0_i32 = arith.constant 0 : i32
    %c0_i32_0 = arith.constant 0 : i32
    %c0_i32_1 = arith.constant 0 : i32
    return %c0_i32, %c0_i32_0 : i32, i32
  }
  func.func @transform_10(%arg0: i32) -> (i32, i32) {
    %c0_i32 = arith.constant 0 : i32
    %c0_i32_0 = arith.constant 0 : i32
    %c0_i32_1 = arith.constant 0 : i32
    return %c0_i32, %c0_i32_0 : i32, i32
  }
  func.func @transform_11(%arg0: i32) -> (i32, i32) {
    %c0_i32 = arith.constant 0 : i32
    %c0_i32_0 = arith.constant 0 : i32
    %c0_i32_1 = arith.constant 0 : i32
    return %c0_i32, %c0_i32_0 : i32, i32
  }
  func.func @transform_12(%arg0: i32) -> (i32, i32) {
    %c0_i32 = arith.constant 0 : i32
    %c0_i32_0 = arith.constant 0 : i32
    %c0_i32_1 = arith.constant 0 : i32
    return %c0_i32, %c0_i32_0 : i32, i32
  }
  func.func @transform_13(%arg0: i32) -> (i32, i32) {
    %c0_i32 = arith.constant 0 : i32
    %c0_i32_0 = arith.constant 0 : i32
    %c0_i32_1 = arith.constant 0 : i32
    return %c0_i32, %c0_i32_0 : i32, i32
  }
  func.func @transform_14(%arg0: i32) -> (i32, i32) {
    %c0_i32 = arith.constant 0 : i32
    %c0_i32_0 = arith.constant 0 : i32
    %c0_i32_1 = arith.constant 0 : i32
    return %c0_i32, %c0_i32_0 : i32, i32
  }
  func.func @transform_15(%arg0: i32) -> (i32, i32) {
    %c0_i32 = arith.constant 0 : i32
    %c0_i32_0 = arith.constant 0 : i32
    %c0_i32_1 = arith.constant 0 : i32
    return %c0_i32, %c0_i32_0 : i32, i32
  }
  func.func @transform_16(%arg0: i32) -> (i32, i32) {
    %c0_i32 = arith.constant 0 : i32
    %c0_i32_0 = arith.constant 0 : i32
    %c0_i32_1 = arith.constant 0 : i32
    return %c0_i32, %c0_i32_0 : i32, i32
  }
  func.func @transform_17(%arg0: i32) -> (i32, i32) {
    %c0_i32 = arith.constant 0 : i32
    %c0_i32_0 = arith.constant 0 : i32
    return %arg0, %c0_i32 : i32, i32
  }
}

</mosaic_0001>

<llo_original>
// kernel: adnn_forward.1
$region0: #{adnn_forward.1}
  #allocation0 [shape = 'u32[]', space=smem, size = 0x4, offset = 0x4, fixed_abs, tag = 'smem constant byte address 0x4 - core index']
  #allocation1 [shape = 'u32[72,128]{1,0:T(1,128)}', space=vmem, size = 0x9000, scoped, tag = 'internal scratch']
  %s0 = inlined_call_operand.vmem [shape: f32[16,16], index: 0, kind: input, shape index: {}]
  %s1 = inlined_call_operand.vmem [shape: bf16[16,64], index: 1, kind: input, shape index: {}]
  %s2 = inlined_call_operand.vmem [shape: f32[1,64], index: 2, kind: input, shape index: {}]
  %s3 = inlined_call_operand.vmem [shape: bf16[64,128], index: 3, kind: input, shape index: {}]
  %s4 = inlined_call_operand.vmem [shape: f32[1,128], index: 4, kind: input, shape index: {}]
  %s5 = inlined_call_operand.vmem [shape: bf16[128,256], index: 5, kind: input, shape index: {}]
  %s6 = inlined_call_operand.vmem [shape: f32[1,256], index: 6, kind: input, shape index: {}]
  %s7 = inlined_call_operand.vmem [shape: bf16[256,512], index: 7, kind: input, shape index: {}]
  %s8 = inlined_call_operand.vmem [shape: f32[1,512], index: 8, kind: input, shape index: {}]
  %s9 = inlined_call_operand.vmem [shape: bf16[512,256], index: 9, kind: input, shape index: {}]
  %s10 = inlined_call_operand.vmem [shape: f32[1,256], index: 10, kind: input, shape index: {}]
  %s11 = inlined_call_operand.vmem [shape: bf16[256,128], index: 11, kind: input, shape index: {}]
  %s12 = inlined_call_operand.vmem [shape: f32[1,128], index: 12, kind: input, shape index: {}]
  %s13 = inlined_call_operand.vmem [shape: bf16[128,64], index: 13, kind: input, shape index: {}]
  %s14 = inlined_call_operand.vmem [shape: f32[1,64], index: 14, kind: input, shape index: {}]
  %s15 = inlined_call_operand.vmem [shape: bf16[64,4], index: 15, kind: input, shape index: {}]
  %s16 = inlined_call_operand.vmem [shape: f32[1,4], index: 16, kind: input, shape index: {}]
  %s17 = inlined_call_operand.vmem [shape: f32[16,4], index: 17, kind: output, shape index: {}]
  %s18 = sld [smem:[#allocation0]]
  $region101: #{adnn_forward.1} parent=0
    _
  %s20 = ssub.s32 1, %s18
  %s21 = scalar_select 0, %s20, %s18
  loop: start=0, step=1, limit=4
  $region2: #{adnn_forward.1} parent=0 // loop_pre_header
    _
  $region3: #{adnn_forward.1} parent=0 // loop_header
    %s23 = sphi 0, %s27
    %p24 = scmp.ge.s32.totalorder %s23, 4
    %s33 = sphi 0, %s35
    %s36 = sphi 0, %s33
    %s37 = sphi 0, %s36
    %s53 = sphi 0, %s37
    %s57 = sphi 0, %s57
    %s59 = sphi 0, %s57
    %s60 = sphi 0, %s59
    %s74 = sphi 0, %s60
    %s78 = sphi 0, %s78
    %s80 = sphi 0, %s78
    %s81 = sphi 0, %s80
    %s95 = sphi 0, %s81
    %s99 = sphi 0, %s99
    %s101 = sphi 0, %s99
    %s102 = sphi 0, %s101
    %s116 = sphi 0, %s102
    %s120 = sphi 0, %s120
    %s122 = sphi 0, %s120
    %s123 = sphi 0, %s122
    %s137 = sphi 0, %s123
    %s141 = sphi 0, %s141
    %s143 = sphi 0, %s141
    %s144 = sphi 0, %s143
    %s158 = sphi 0, %s144
    %s162 = sphi 0, %s162
    %s164 = sphi 0, %s162
    %s165 = sphi 0, %s164
    %s179 = sphi 0, %s165
    %s183 = sphi 0, %s183
    %s185 = sphi 0, %s183
    %s186 = sphi 0, %s185
    %s200 = sphi 0, %s186
    %s204 = sphi 0, %s204
    %s206 = sphi 0, %s204
    %s207 = sphi 0, %s206
    %s221 = sphi 0, %s207
    %s225 = sphi 0, %s225
    %s227 = sphi 0, %s225
    %s228 = sphi 0, %s227
    %s242 = sphi 0, %s228
    %s246 = sphi 0, %s246
    %s248 = sphi 0, %s246
    %s249 = sphi 0, %s248
    %s263 = sphi 0, %s249
    %s267 = sphi 0, %s267
    %s269 = sphi 0, %s267
    %s270 = sphi 0, %s269
    %s284 = sphi 0, %s270
    %s288 = sphi 0, %s288
    %s290 = sphi 0, %s288
    %s291 = sphi 0, %s290
    %s305 = sphi 0, %s291
    %s309 = sphi 0, %s309
    %s311 = sphi 0, %s309
    %s312 = sphi 0, %s311
    %s326 = sphi 0, %s312
    %s330 = sphi 0, %s330
    %s332 = sphi 0, %s330
    %s333 = sphi 0, %s332
    %s347 = sphi 0, %s333
    %s351 = sphi 0, %s351
    %s353 = sphi 0, %s351
    %s354 = sphi 0, %s353
    %s368 = sphi 0, %s354
    %s372 = sphi 0, %s372
    %s374 = sphi 0, %s372
    %s375 = sphi 0, %s374
    %s389 = sphi 0, %s375
    %s395 = sphi 0, %s397
    %s398 = sphi 0, %s395
    %s399 = sphi 0, %s398
    %s415 = sphi 0, %s399
  $region4: #{adnn_forward.1} parent=0 // loop_header_branch
    %26 = sbr.rel (%p24) target = $region8
  $region5: #{adnn_forward.1} parent=0 // loop_body
    %s28 = ssub.s32 %s23, 1
    %s29 = ssub.s32 %s23, 2
    %s30 = sadd.s32 %s23, 1
    %s31 = ssub.s32 %s23, %s30
    %p32 = scmp.eq.s32.totalorder %s31, 0
    %s34 = sadd.s32 %s33, 1
    %s35 = scalar_select %p32, %s33, %s34
    %p38 = pneg %p32
    %p39 = scmp.eq.s32.totalorder %s23, 1
    %p40 = por %p38, %p39
    %p41 = scmp.ne.s32.totalorder %s33, %s36
    %p42 = scmp.eq.s32.totalorder %s23, 0
    %p43 = por %p41, %p42
    %p44 = scmp.ne.s32.totalorder %s33, %s36
    %p45 = scmp.eq.s32.totalorder %s28, 1
    %p46 = por %p44, %p45
    %p47 = scmp.ne.s32.totalorder %s36, %s37
    %p48 = scmp.eq.s32.totalorder %s28, 0
    %p49 = por %p47, %p48
    %p50 = scmp.ne.s32.totalorder %s36, %s37
    %p51 = scmp.eq.s32.totalorder %s29, 1
    %p52 = por %p50, %p51
    %p54 = scmp.ne.s32.totalorder %s37, %s53
    %p55 = scmp.eq.s32.totalorder %s29, 0
    %p56 = por %p54, %p55
    %s58 = sadd.s32 %s57, 1
    %p61 = scmp.eq.s32.totalorder %s23, 1
    %p62 = scmp.ne.s32.totalorder %s57, %s59
    %p63 = scmp.eq.s32.totalorder %s23, 0
    %p64 = por %p62, %p63
    %p65 = scmp.ne.s32.totalorder %s57, %s59
    %p66 = scmp.eq.s32.totalorder %s28, 1
    %p67 = por %p65, %p66
    %p68 = scmp.ne.s32.totalorder %s59, %s60
    %p69 = scmp.eq.s32.totalorder %s28, 0
    %p70 = por %p68, %p69
    %p71 = scmp.ne.s32.totalorder %s59, %s60
    %p72 = scmp.eq.s32.totalorder %s29, 1
    %p73 = por %p71, %p72
    %p75 = scmp.ne.s32.totalorder %s60, %s74
    %p76 = scmp.eq.s32.totalorder %s29, 0
    %p77 = por %p75, %p76
    %s79 = sadd.s32 %s78, 1
    %p82 = scmp.eq.s32.totalorder %s23, 1
    %p83 = scmp.ne.s32.totalorder %s78, %s80
    %p84 = scmp.eq.s32.totalorder %s23, 0
    %p85 = por %p83, %p84
    %p86 = scmp.ne.s32.totalorder %s78, %s80
    %p87 = scmp.eq.s32.totalorder %s28, 1
    %p88 = por %p86, %p87
    %p89 = scmp.ne.s32.totalorder %s80, %s81
    %p90 = scmp.eq.s32.totalorder %s28, 0
    %p91 = por %p89, %p90
    %p92 = scmp.ne.s32.totalorder %s80, %s81
    %p93 = scmp.eq.s32.totalorder %s29, 1
    %p94 = por %p92, %p93
    %p96 = scmp.ne.s32.totalorder %s81, %s95
    %p97 = scmp.eq.s32.totalorder %s29, 0
    %p98 = por %p96, %p97
    %s100 = sadd.s32 %s99, 1
    %p103 = scmp.eq.s32.totalorder %s23, 1
    %p104 = scmp.ne.s32.totalorder %s99, %s101
    %p105 = scmp.eq.s32.totalorder %s23, 0
    %p106 = por %p104, %p105
    %p107 = scmp.ne.s32.totalorder %s99, %s101
    %p108 = scmp.eq.s32.totalorder %s28, 1
    %p109 = por %p107, %p108
    %p110 = scmp.ne.s32.totalorder %s101, %s102
    %p111 = scmp.eq.s32.totalorder %s28, 0
    %p112 = por %p110, %p111
    %p113 = scmp.ne.s32.totalorder %s101, %s102
    %p114 = scmp.eq.s32.totalorder %s29, 1
    %p115 = por %p113, %p114
    %p117 = scmp.ne.s32.totalorder %s102, %s116
    %p118 = scmp.eq.s32.totalorder %s29, 0
    %p119 = por %p117, %p118
    %s121 = sadd.s32 %s120, 1
    %p124 = scmp.eq.s32.totalorder %s23, 1
    %p125 = scmp.ne.s32.totalorder %s120, %s122
    %p126 = scmp.eq.s32.totalorder %s23, 0
    %p127 = por %p125, %p126
    %p128 = scmp.ne.s32.totalorder %s120, %s122
    %p129 = scmp.eq.s32.totalorder %s28, 1
    %p130 = por %p128, %p129
    %p131 = scmp.ne.s32.totalorder %s122, %s123
    %p132 = scmp.eq.s32.totalorder %s28, 0
    %p133 = por %p131, %p132
    %p134 = scmp.ne.s32.totalorder %s122, %s123
    %p135 = scmp.eq.s32.totalorder %s29, 1
    %p136 = por %p134, %p135
    %p138 = scmp.ne.s32.totalorder %s123, %s137
    %p139 = scmp.eq.s32.totalorder %s29, 0
    %p140 = por %p138, %p139
    %s142 = sadd.s32 %s141, 1
    %p145 = scmp.eq.s32.totalorder %s23, 1
    %p146 = scmp.ne.s32.totalorder %s141, %s143
    %p147 = scmp.eq.s32.totalorder %s23, 0
    %p148 = por %p146, %p147
    %p149 = scmp.ne.s32.totalorder %s141, %s143
    %p150 = scmp.eq.s32.totalorder %s28, 1
    %p151 = por %p149, %p150
    %p152 = scmp.ne.s32.totalorder %s143, %s144
    %p153 = scmp.eq.s32.totalorder %s28, 0
    %p154 = por %p152, %p153
    %p155 = scmp.ne.s32.totalorder %s143, %s144
    %p156 = scmp.eq.s32.totalorder %s29, 1
    %p157 = por %p155, %p156
    %p159 = scmp.ne.s32.totalorder %s144, %s158
    %p160 = scmp.eq.s32.totalorder %s29, 0
    %p161 = por %p159, %p160
    %s163 = sadd.s32 %s162, 1
    %p166 = scmp.eq.s32.totalorder %s23, 1
    %p167 = scmp.ne.s32.totalorder %s162, %s164
    %p168 = scmp.eq.s32.totalorder %s23, 0
    %p169 = por %p167, %p168
    %p170 = scmp.ne.s32.totalorder %s162, %s164
    %p171 = scmp.eq.s32.totalorder %s28, 1
    %p172 = por %p170, %p171
    %p173 = scmp.ne.s32.totalorder %s164, %s165
    %p174 = scmp.eq.s32.totalorder %s28, 0
    %p175 = por %p173, %p174
    %p176 = scmp.ne.s32.totalorder %s164, %s165
    %p177 = scmp.eq.s32.totalorder %s29, 1
    %p178 = por %p176, %p177
    %p180 = scmp.ne.s32.totalorder %s165, %s179
    %p181 = scmp.eq.s32.totalorder %s29, 0
    %p182 = por %p180, %p181
    %s184 = sadd.s32 %s183, 1
    %p187 = scmp.eq.s32.totalorder %s23, 1
    %p188 = scmp.ne.s32.totalorder %s183, %s185
    %p189 = scmp.eq.s32.totalorder %s23, 0
    %p190 = por %p188, %p189
    %p191 = scmp.ne.s32.totalorder %s183, %s185
    %p192 = scmp.eq.s32.totalorder %s28, 1
    %p193 = por %p191, %p192
    %p194 = scmp.ne.s32.totalorder %s185, %s186
    %p195 = scmp.eq.s32.totalorder %s28, 0
    %p196 = por %p194, %p195
    %p197 = scmp.ne.s32.totalorder %s185, %s186
    %p198 = scmp.eq.s32.totalorder %s29, 1
    %p199 = por %p197, %p198
    %p201 = scmp.ne.s32.totalorder %s186, %s200
    %p202 = scmp.eq.s32.totalorder %s29, 0
    %p203 = por %p201, %p202
    %s205 = sadd.s32 %s204, 1
    %p208 = scmp.eq.s32.totalorder %s23, 1
    %p209 = scmp.ne.s32.totalorder %s204, %s206
    %p210 = scmp.eq.s32.totalorder %s23, 0
    %p211 = por %p209, %p210
    %p212 = scmp.ne.s32.totalorder %s204, %s206
    %p213 = scmp.eq.s32.totalorder %s28, 1
    %p214 = por %p212, %p213
    %p215 = scmp.ne.s32.totalorder %s206, %s207
    %p216 = scmp.eq.s32.totalorder %s28, 0
    %p217 = por %p215, %p216
    %p218 = scmp.ne.s32.totalorder %s206, %s207
    %p219 = scmp.eq.s32.totalorder %s29, 1
    %p220 = por %p218, %p219
    %p222 = scmp.ne.s32.totalorder %s207, %s221
    %p223 = scmp.eq.s32.totalorder %s29, 0
    %p224 = por %p222, %p223
    %s226 = sadd.s32 %s225, 1
    %p229 = scmp.eq.s32.totalorder %s23, 1
    %p230 = scmp.ne.s32.totalorder %s225, %s227
    %p231 = scmp.eq.s32.totalorder %s23, 0
    %p232 = por %p230, %p231
    %p233 = scmp.ne.s32.totalorder %s225, %s227
    %p234 = scmp.eq.s32.totalorder %s28, 1
    %p235 = por %p233, %p234
    %p236 = scmp.ne.s32.totalorder %s227, %s228
    %p237 = scmp.eq.s32.totalorder %s28, 0
    %p238 = por %p236, %p237
    %p239 = scmp.ne.s32.totalorder %s227, %s228
    %p240 = scmp.eq.s32.totalorder %s29, 1
    %p241 = por %p239, %p240
    %p243 = scmp.ne.s32.totalorder %s228, %s242
    %p244 = scmp.eq.s32.totalorder %s29, 0
    %p245 = por %p243, %p244
    %s247 = sadd.s32 %s246, 1
    %p250 = scmp.eq.s32.totalorder %s23, 1
    %p251 = scmp.ne.s32.totalorder %s246, %s248
    %p252 = scmp.eq.s32.totalorder %s23, 0
    %p253 = por %p251, %p252
    %p254 = scmp.ne.s32.totalorder %s246, %s248
    %p255 = scmp.eq.s32.totalorder %s28, 1
    %p256 = por %p254, %p255
    %p257 = scmp.ne.s32.totalorder %s248, %s249
    %p258 = scmp.eq.s32.totalorder %s28, 0
    %p259 = por %p257, %p258
    %p260 = scmp.ne.s32.totalorder %s248, %s249
    %p261 = scmp.eq.s32.totalorder %s29, 1
    %p262 = por %p260, %p261
    %p264 = scmp.ne.s32.totalorder %s249, %s263
    %p265 = scmp.eq.s32.totalorder %s29, 0
    %p266 = por %p264, %p265
    %s268 = sadd.s32 %s267, 1
    %p271 = scmp.eq.s32.totalorder %s23, 1
    %p272 = scmp.ne.s32.totalorder %s267, %s269
    %p273 = scmp.eq.s32.totalorder %s23, 0
    %p274 = por %p272, %p273
    %p275 = scmp.ne.s32.totalorder %s267, %s269
    %p276 = scmp.eq.s32.totalorder %s28, 1
    %p277 = por %p275, %p276
    %p278 = scmp.ne.s32.totalorder %s269, %s270
    %p279 = scmp.eq.s32.totalorder %s28, 0
    %p280 = por %p278, %p279
    %p281 = scmp.ne.s32.totalorder %s269, %s270
    %p282 = scmp.eq.s32.totalorder %s29, 1
    %p283 = por %p281, %p282
    %p285 = scmp.ne.s32.totalorder %s270, %s284
    %p286 = scmp.eq.s32.totalorder %s29, 0
    %p287 = por %p285, %p286
    %s289 = sadd.s32 %s288, 1
    %p292 = scmp.eq.s32.totalorder %s23, 1
    %p293 = scmp.ne.s32.totalorder %s288, %s290
    %p294 = scmp.eq.s32.totalorder %s23, 0
    %p295 = por %p293, %p294
    %p296 = scmp.ne.s32.totalorder %s288, %s290
    %p297 = scmp.eq.s32.totalorder %s28, 1
    %p298 = por %p296, %p297
    %p299 = scmp.ne.s32.totalorder %s290, %s291
    %p300 = scmp.eq.s32.totalorder %s28, 0
    %p301 = por %p299, %p300
    %p302 = scmp.ne.s32.totalorder %s290, %s291
    %p303 = scmp.eq.s32.totalorder %s29, 1
    %p304 = por %p302, %p303
    %p306 = scmp.ne.s32.totalorder %s291, %s305
    %p307 = scmp.eq.s32.totalorder %s29, 0
    %p308 = por %p306, %p307
    %s310 = sadd.s32 %s309, 1
    %p313 = scmp.eq.s32.totalorder %s23, 1
    %p314 = scmp.ne.s32.totalorder %s309, %s311
    %p315 = scmp.eq.s32.totalorder %s23, 0
    %p316 = por %p314, %p315
    %p317 = scmp.ne.s32.totalorder %s309, %s311
    %p318 = scmp.eq.s32.totalorder %s28, 1
    %p319 = por %p317, %p318
    %p320 = scmp.ne.s32.totalorder %s311, %s312
    %p321 = scmp.eq.s32.totalorder %s28, 0
    %p322 = por %p320, %p321
    %p323 = scmp.ne.s32.totalorder %s311, %s312
    %p324 = scmp.eq.s32.totalorder %s29, 1
    %p325 = por %p323, %p324
    %p327 = scmp.ne.s32.totalorder %s312, %s326
    %p328 = scmp.eq.s32.totalorder %s29, 0
    %p329 = por %p327, %p328
    %s331 = sadd.s32 %s330, 1
    %p334 = scmp.eq.s32.totalorder %s23, 1
    %p335 = scmp.ne.s32.totalorder %s330, %s332
    %p336 = scmp.eq.s32.totalorder %s23, 0
    %p337 = por %p335, %p336
    %p338 = scmp.ne.s32.totalorder %s330, %s332
    %p339 = scmp.eq.s32.totalorder %s28, 1
    %p340 = por %p338, %p339
    %p341 = scmp.ne.s32.totalorder %s332, %s333
    %p342 = scmp.eq.s32.totalorder %s28, 0
    %p343 = por %p341, %p342
    %p344 = scmp.ne.s32.totalorder %s332, %s333
    %p345 = scmp.eq.s32.totalorder %s29, 1
    %p346 = por %p344, %p345
    %p348 = scmp.ne.s32.totalorder %s333, %s347
    %p349 = scmp.eq.s32.totalorder %s29, 0
    %p350 = por %p348, %p349
    %s352 = sadd.s32 %s351, 1
    %p355 = scmp.eq.s32.totalorder %s23, 1
    %p356 = scmp.ne.s32.totalorder %s351, %s353
    %p357 = scmp.eq.s32.totalorder %s23, 0
    %p358 = por %p356, %p357
    %p359 = scmp.ne.s32.totalorder %s351, %s353
    %p360 = scmp.eq.s32.totalorder %s28, 1
    %p361 = por %p359, %p360
    %p362 = scmp.ne.s32.totalorder %s353, %s354
    %p363 = scmp.eq.s32.totalorder %s28, 0
    %p364 = por %p362, %p363
    %p365 = scmp.ne.s32.totalorder %s353, %s354
    %p366 = scmp.eq.s32.totalorder %s29, 1
    %p367 = por %p365, %p366
    %p369 = scmp.ne.s32.totalorder %s354, %s368
    %p370 = scmp.eq.s32.totalorder %s29, 0
    %p371 = por %p369, %p370
    %s373 = sadd.s32 %s372, 1
    %p376 = scmp.eq.s32.totalorder %s23, 1
    %p377 = scmp.ne.s32.totalorder %s372, %s374
    %p378 = scmp.eq.s32.totalorder %s23, 0
    %p379 = por %p377, %p378
    %p380 = scmp.ne.s32.totalorder %s372, %s374
    %p381 = scmp.eq.s32.totalorder %s28, 1
    %p382 = por %p380, %p381
    %p383 = scmp.ne.s32.totalorder %s374, %s375
    %p384 = scmp.eq.s32.totalorder %s28, 0
    %p385 = por %p383, %p384
    %p386 = scmp.ne.s32.totalorder %s374, %s375
    %p387 = scmp.eq.s32.totalorder %s29, 1
    %p388 = por %p386, %p387
    %p390 = scmp.ne.s32.totalorder %s375, %s389
    %p391 = scmp.eq.s32.totalorder %s29, 0
    %p392 = por %p390, %p391
    %s393 = ssub.s32 %s23, %s30
    %p394 = scmp.eq.s32.totalorder %s393, 0
    %s396 = sadd.s32 %s395, 1
    %s397 = scalar_select %p394, %s395, %s396
    %p400 = pneg %p394
    %p401 = scmp.eq.s32.totalorder %s23, 1
    %p402 = por %p400, %p401
    %p403 = scmp.ne.s32.totalorder %s395, %s398
    %p404 = scmp.eq.s32.totalorder %s23, 0
    %p405 = por %p403, %p404
    %p406 = scmp.ne.s32.totalorder %s395, %s398
    %p407 = scmp.eq.s32.totalorder %s28, 1
    %p408 = por %p406, %p407
    %p409 = scmp.ne.s32.totalorder %s398, %s399
    %p410 = scmp.eq.s32.totalorder %s28, 0
    %p411 = por %p409, %p410
    %p412 = scmp.ne.s32.totalorder %s398, %s399
    %p413 = scmp.eq.s32.totalorder %s29, 1
    %p414 = por %p412, %p413
    %p416 = scmp.ne.s32.totalorder %s399, %s415
    %p417 = scmp.eq.s32.totalorder %s29, 0
    %p418 = por %p416, %p417
    %p419 = scmp.le.s32.totalorder 1, %s23
    %p420 = scmp.lt.s32.totalorder %s23, 3
    %p421 = pnand %p419, %p420
    %p422 = pneg %p421
    // Predicated region
    $region9: #{adnn_forward.1} parent=5 // pred_check
      _
    $region10: #{adnn_forward.1} parent=5 // pred_check_branch
      %424 = sbr.rel (%p421) target = $region12
    $region11: #{adnn_forward.1} parent=5 // pred_region
      %s425 = ssub.s32 %s23, 1
      // Predicated region
      $region13: #{adnn_forward.1} parent=11 // pred_check
        %p426 = pneg %p70
      $region14: #{adnn_forward.1} parent=11 // pred_check_branch
        %428 = sbr.rel (%p426) target = $region16
      $region15: #{adnn_forward.1} parent=11 // pred_region
        _
      $region16: #{adnn_forward.1} parent=11 // pred_fallthru
        _
      // Predicated region
      $region17: #{adnn_forward.1} parent=11 // pred_check
        %p429 = pneg %p91
      $region18: #{adnn_forward.1} parent=11 // pred_check_branch
        %431 = sbr.rel (%p429) target = $region20
      $region19: #{adnn_forward.1} parent=11 // pred_region
        _
      $region20: #{adnn_forward.1} parent=11 // pred_fallthru
        _
      // Predicated region
      $region21: #{adnn_forward.1} parent=11 // pred_check
        %p432 = pneg %p112
      $region22: #{adnn_forward.1} parent=11 // pred_check_branch
        %434 = sbr.rel (%p432) target = $region24
      $region23: #{adnn_forward.1} parent=11 // pred_region
        _
      $region24: #{adnn_forward.1} parent=11 // pred_fallthru
        _
      // Predicated region
      $region25: #{adnn_forward.1} parent=11 // pred_check
        %p435 = pneg %p133
      $region26: #{adnn_forward.1} parent=11 // pred_check_branch
        %437 = sbr.rel (%p435) target = $region28
      $region27: #{adnn_forward.1} parent=11 // pred_region
        _
      $region28: #{adnn_forward.1} parent=11 // pred_fallthru
        _
      // Predicated region
      $region29: #{adnn_forward.1} parent=11 // pred_check
        %p438 = pneg %p154
      $region30: #{adnn_forward.1} parent=11 // pred_check_branch
        %440 = sbr.rel (%p438) target = $region32
      $region31: #{adnn_forward.1} parent=11 // pred_region
        _
      $region32: #{adnn_forward.1} parent=11 // pred_fallthru
        _
      // Predicated region
      $region33: #{adnn_forward.1} parent=11 // pred_check
        %p441 = pneg %p175
      $region34: #{adnn_forward.1} parent=11 // pred_check_branch
        %443 = sbr.rel (%p441) target = $region36
      $region35: #{adnn_forward.1} parent=11 // pred_region
        _
      $region36: #{adnn_forward.1} parent=11 // pred_fallthru
        _
      // Predicated region
      $region37: #{adnn_forward.1} parent=11 // pred_check
        %p444 = pneg %p196
      $region38: #{adnn_forward.1} parent=11 // pred_check_branch
        %446 = sbr.rel (%p444) target = $region40
      $region39: #{adnn_forward.1} parent=11 // pred_region
        _
      $region40: #{adnn_forward.1} parent=11 // pred_fallthru
        _
      // Predicated region
      $region41: #{adnn_forward.1} parent=11 // pred_check
        %p447 = pneg %p217
      $region42: #{adnn_forward.1} parent=11 // pred_check_branch
        %449 = sbr.rel (%p447) target = $region44
      $region43: #{adnn_forward.1} parent=11 // pred_region
        _
      $region44: #{adnn_forward.1} parent=11 // pred_fallthru
        _
      // Predicated region
      $region45: #{adnn_forward.1} parent=11 // pred_check
        %p450 = pneg %p238
      $region46: #{adnn_forward.1} parent=11 // pred_check_branch
        %452 = sbr.rel (%p450) target = $region48
      $region47: #{adnn_forward.1} parent=11 // pred_region
        _
      $region48: #{adnn_forward.1} parent=11 // pred_fallthru
        _
      // Predicated region
      $region49: #{adnn_forward.1} parent=11 // pred_check
        %p453 = pneg %p259
      $region50: #{adnn_forward.1} parent=11 // pred_check_branch
        %455 = sbr.rel (%p453) target = $region52
      $region51: #{adnn_forward.1} parent=11 // pred_region
        _
      $region52: #{adnn_forward.1} parent=11 // pred_fallthru
        _
      // Predicated region
      $region53: #{adnn_forward.1} parent=11 // pred_check
        %p456 = pneg %p280
      $region54: #{adnn_forward.1} parent=11 // pred_check_branch
        %458 = sbr.rel (%p456) target = $region56
      $region55: #{adnn_forward.1} parent=11 // pred_region
        _
      $region56: #{adnn_forward.1} parent=11 // pred_fallthru
        _
      // Predicated region
      $region57: #{adnn_forward.1} parent=11 // pred_check
        %p459 = pneg %p301
      $region58: #{adnn_forward.1} parent=11 // pred_check_branch
        %461 = sbr.rel (%p459) target = $region60
      $region59: #{adnn_forward.1} parent=11 // pred_region
        _
      $region60: #{adnn_forward.1} parent=11 // pred_fallthru
        _
      // Predicated region
      $region61: #{adnn_forward.1} parent=11 // pred_check
        %p462 = pneg %p322
      $region62: #{adnn_forward.1} parent=11 // pred_check_branch
        %464 = sbr.rel (%p462) target = $region64
      $region63: #{adnn_forward.1} parent=11 // pred_region
        _
      $region64: #{adnn_forward.1} parent=11 // pred_fallthru
        _
      // Predicated region
      $region65: #{adnn_forward.1} parent=11 // pred_check
        %p465 = pneg %p343
      $region66: #{adnn_forward.1} parent=11 // pred_check_branch
        %467 = sbr.rel (%p465) target = $region68
      $region67: #{adnn_forward.1} parent=11 // pred_region
        _
      $region68: #{adnn_forward.1} parent=11 // pred_fallthru
        _
      // Predicated region
      $region69: #{adnn_forward.1} parent=11 // pred_check
        %p468 = pneg %p364
      $region70: #{adnn_forward.1} parent=11 // pred_check_branch
        %470 = sbr.rel (%p468) target = $region72
      $region71: #{adnn_forward.1} parent=11 // pred_region
        _
      $region72: #{adnn_forward.1} parent=11 // pred_fallthru
        _
      // Predicated region
      $region73: #{adnn_forward.1} parent=11 // pred_check
        %p471 = pneg %p385
      $region74: #{adnn_forward.1} parent=11 // pred_check_branch
        %473 = sbr.rel (%p471) target = $region76
      $region75: #{adnn_forward.1} parent=11 // pred_region
        _
      $region76: #{adnn_forward.1} parent=11 // pred_fallthru
        _
    $region12: #{adnn_forward.1} parent=5 // pred_fallthru
      _
    %p474 = scmp.lt.s32.totalorder %s23, 2
    // Predicated region
    $region77: #{adnn_forward.1} parent=5 // pred_check
      %p475 = pneg %p474
    $region78: #{adnn_forward.1} parent=5 // pred_check_branch
      %477 = sbr.rel (%p475) target = $region80
    $region79: #{adnn_forward.1} parent=5 // pred_region
      // Predicated region
      $region81: #{adnn_forward.1} parent=79 // pred_check
        %p478 = pneg %p43
      $region82: #{adnn_forward.1} parent=79 // pred_check_branch
        %480 = sbr.rel (%p478) target = $region84
      $region83: #{adnn_forward.1} parent=79 // pred_region
        %p481 = scmp.lt.s32.totalorder %s23, 1
        %s482 = scalar_select %p481, %s23, 1
        %s483 = smul.addr %s482, 8
        %s484 = scalar_lea.vmem %s0, %s483
      $region84: #{adnn_forward.1} parent=79 // pred_fallthru
        _
    $region80: #{adnn_forward.1} parent=5 // pred_fallthru
      _
    %p485 = scmp.le.s32.totalorder 1, %s23
    %p486 = scmp.lt.s32.totalorder %s23, 3
    %p487 = pnand %p485, %p486
    %p488 = pneg %p487
    // Predicated region
    $region85: #{adnn_forward.1} parent=5 // pred_check
      _
    $region86: #{adnn_forward.1} parent=5 // pred_check_branch
      %490 = sbr.rel (%p487) target = $region88
    $region87: #{adnn_forward.1} parent=5 // pred_region
      %s491 = ssub.s32 %s23, 1
      %p492 = scmp.lt.s32.totalorder %s28, 1
      %s493 = scalar_select %p492, %s28, 1
      %s494 = smul.addr %s493, 8
      %s495 = scalar_lea.vmem %s0, %s494
      %p496 = pneg %p49
      %p497 = pneg %p46
      %p498 = pneg %p70
      %p499 = pneg %p67
      %p500 = pneg %p91
      %p501 = pneg %p88
      %p502 = pneg %p112
      %p503 = pneg %p109
      %p504 = pneg %p133
      %p505 = pneg %p130
      %p506 = pneg %p154
      %p507 = pneg %p151
      %p508 = pneg %p175
      %p509 = pneg %p172
      %p510 = pneg %p196
      %p511 = pneg %p193
      %p512 = pneg %p217
      %p513 = pneg %p214
      %p514 = pneg %p238
      %p515 = pneg %p235
      %p516 = pneg %p259
      %p517 = pneg %p256
      %p518 = pneg %p280
      %p519 = pneg %p277
      %p520 = pneg %p301
      %p521 = pneg %p298
      %p522 = pneg %p322
      %p523 = pneg %p319
      %p524 = pneg %p343
      %p525 = pneg %p340
      %p526 = pneg %p364
      %p527 = pneg %p361
      %p528 = pneg %p385
      %p529 = pneg %p382
      %p530 = pneg %p411
      %p531 = pneg %p408
      %p532 = scmp.lt.s32.totalorder %s28, 1
      %s533 = scalar_select %p532, %s28, 1
      %s534 = smul.addr %s533, 8
      %s535 = scalar_lea.vmem %s17, %s534
      %p536 = scmp.lt.s32.totalorder %s28, 1
      %s537 = scalar_select %p536, %s28, 1
      %s538 = smul.addr %s537, 8
      %s539 = scalar_lea.vmem %s0, %s538
      %p540 = scmp.lt.s32.totalorder %s28, 1
      %s541 = scalar_select %p540, %s28, 1
      %s542 = smul.addr %s541, 8
      %s543 = scalar_lea.vmem %s17, %s542
      %v545 = vld [vmem:[%s539] sm:$0xff]
      %v546 = vld [vmem:[%s1] sm:$0xf]
      %v547 = vld [vmem:[%s1 + $0x4] sm:$0xf]
      %v548 = vld [vmem:[%s2] sm:$0x1]
      %v549 = vpack.c.bf16 %v545, %v545
      %v551 = vperm.slane %v548, 0
      %v555 = vunpack.c.l.b16 %v546
      %v556 = vunpack.c.l.b16 %v547
      %v557 = vpack.c.b16 %v556, %v555
      %vm559 = vcmask 130048
      %v561 = vsel %vm559, %v549, 0
      %563 = vmatpush.bf16.msra.mxu0 0
      %564 = vmatpush.bf16.msra.mxu0 0
      %565 = vmatpush.bf16.msra.mxu0 0
      %566 = vmatpush.bf16.msra.mxu0 0
      %567 = vmatpush.bf16.msra.mxu0 0
      %568 = vmatpush.bf16.msra.mxu0 0
      %569 = vmatpush.bf16.msra.mxu0 0
      %570 = vmatpush.bf16.msra.mxu0 %v557
      %571 = vmatmul.bf16.gmra.mxu0 %v561
      %v572 = vpop.f32.mrf.mxu0
      %v573 = vadd.f32 %v551, %v572
      %v574 = vpop.f32.mrf.mxu0
      %575 = vdwg.mxu0
      %v576 = vmax.f32 %v573, 0.0
      %v577 = vld [vmem:[%s3] sm:$0xf]
      %v578 = vld [vmem:[%s3 + $0x4] sm:$0xf]
      %v579 = vld [vmem:[%s3 + $0x8] sm:$0xf]
      %v580 = vld [vmem:[%s3 + $0xc] sm:$0xf]
      %v581 = vld [vmem:[%s3 + $0x10] sm:$0xf]
      %v582 = vld [vmem:[%s3 + $0x14] sm:$0xf]
      %v583 = vld [vmem:[%s3 + $0x18] sm:$0xf]
      %v584 = vld [vmem:[%s3 + $0x1c] sm:$0xf]
      %v585 = vld [vmem:[%s4] sm:$0x1]
      %v586 = vpack.c.bf16 %v576, %v576
      %v588 = vperm.slane %v585, 0
      %v598 = vunpack.c.l.b16 %v577
      %v599 = vunpack.c.l.b16 %v578
      %v600 = vunpack.c.l.b16 %v579
      %v601 = vunpack.c.l.b16 %v580
      %v602 = vunpack.c.l.b16 %v581
      %v603 = vunpack.c.l.b16 %v582
      %v604 = vunpack.c.l.b16 %v583
      %v605 = vunpack.c.l.b16 %v584
      %v606 = vpack.c.b16 %v599, %v598
      %v607 = vpack.c.b16 %v601, %v600
      %v608 = vpack.c.b16 %v603, %v602
      %v609 = vpack.c.b16 %v605, %v604
      %vm614 = vcmask 523264
      %v616 = vsel %vm614, %v586, 0
      %618 = vmatpush.bf16.msra.mxu0 0
      %619 = vmatpush.bf16.msra.mxu0 0
      %620 = vmatpush.bf16.msra.mxu0 0
      %621 = vmatpush.bf16.msra.mxu0 0
      %622 = vmatpush.bf16.msra.mxu0 %v609
      %623 = vmatpush.bf16.msra.mxu0 %v608
      %624 = vmatpush.bf16.msra.mxu0 %v607
      %625 = vmatpush.bf16.msra.mxu0 %v606
      %626 = vmatmul.bf16.gmra.mxu0 %v616
      %v627 = vpop.f32.mrf.mxu0
      %v628 = vadd.f32 %v588, %v627
      %v629 = vpop.f32.mrf.mxu0
      %630 = vdwg.mxu0
      %v631 = vmax.f32 %v628, 0.0
      %v632 = vld [vmem:[%s5] sm:$0xff]
      %v633 = vld [vmem:[%s5 + $0x8] sm:$0xff]
      %v634 = vld [vmem:[%s5 + $0x10] sm:$0xff]
      %v635 = vld [vmem:[%s5 + $0x18] sm:$0xff]
      %v636 = vld [vmem:[%s5 + $0x20] sm:$0xff]
      %v637 = vld [vmem:[%s5 + $0x28] sm:$0xff]
      %v638 = vld [vmem:[%s5 + $0x30] sm:$0xff]
      %v639 = vld [vmem:[%s5 + $0x38] sm:$0xff]
      %v640 = vld [vmem:[%s5 + $0x40] sm:$0xff]
      %v641 = vld [vmem:[%s5 + $0x48] sm:$0xff]
      %v642 = vld [vmem:[%s5 + $0x50] sm:$0xff]
      %v643 = vld [vmem:[%s5 + $0x58] sm:$0xff]
      %v644 = vld [vmem:[%s5 + $0x60] sm:$0xff]
      %v645 = vld [vmem:[%s5 + $0x68] sm:$0xff]
      %v646 = vld [vmem:[%s5 + $0x70] sm:$0xff]
      %v647 = vld [vmem:[%s5 + $0x78] sm:$0xff]
      %v648 = vld [vmem:[%s6] sm:$0x3]
      %v649 = vpack.c.bf16 %v631, %v631
      %v651 = vperm.slane %v648, 0
      %v652 = vperm.slane %v648, 1
      %v671 = vunpack.c.l.b16 %v632
      %v672 = vunpack.c.h.b16 %v632
      %v673 = vunpack.c.l.b16 %v633
      %v674 = vunpack.c.h.b16 %v633
      %v675 = vunpack.c.l.b16 %v634
      %v676 = vunpack.c.h.b16 %v634
      %v677 = vunpack.c.l.b16 %v635
      %v678 = vunpack.c.h.b16 %v635
      %v679 = vunpack.c.l.b16 %v636
      %v680 = vunpack.c.h.b16 %v636
      %v681 = vunpack.c.l.b16 %v637
      %v682 = vunpack.c.h.b16 %v637
      %v683 = vunpack.c.l.b16 %v638
      %v684 = vunpack.c.h.b16 %v638
      %v685 = vunpack.c.l.b16 %v639
      %v686 = vunpack.c.h.b16 %v639
      %v687 = vunpack.c.l.b16 %v640
      %v688 = vunpack.c.h.b16 %v640
      %v689 = vunpack.c.l.b16 %v641
      %v690 = vunpack.c.h.b16 %v641
      %v691 = vunpack.c.l.b16 %v642
      %v692 = vunpack.c.h.b16 %v642
      %v693 = vunpack.c.l.b16 %v643
      %v694 = vunpack.c.h.b16 %v643
      %v695 = vunpack.c.l.b16 %v644
      %v696 = vunpack.c.h.b16 %v644
      %v697 = vunpack.c.l.b16 %v645
      %v698 = vunpack.c.h.b16 %v645
      %v699 = vunpack.c.l.b16 %v646
      %v700 = vunpack.c.h.b16 %v646
      %v701 = vunpack.c.l.b16 %v647
      %v702 = vunpack.c.h.b16 %v647
      %v703 = vpack.c.b16 %v673, %v671
      %v704 = vpack.c.b16 %v674, %v672
      %v705 = vpack.c.b16 %v677, %v675
      %v706 = vpack.c.b16 %v678, %v676
      %v707 = vpack.c.b16 %v681, %v679
      %v708 = vpack.c.b16 %v682, %v680
      %v709 = vpack.c.b16 %v685, %v683
      %v710 = vpack.c.b16 %v686, %v684
      %v711 = vpack.c.b16 %v689, %v687
      %v712 = vpack.c.b16 %v690, %v688
      %v713 = vpack.c.b16 %v693, %v691
      %v714 = vpack.c.b16 %v694, %v692
      %v715 = vpack.c.b16 %v697, %v695
      %v716 = vpack.c.b16 %v698, %v696
      %v717 = vpack.c.b16 %v701, %v699
      %v718 = vpack.c.b16 %v702, %v700
      %735 = vmatpush.bf16.msra.mxu0 %v717
      %736 = vmatpush.bf16.msra.mxu0 %v715
      %737 = vmatpush.bf16.msra.mxu0 %v713
      %738 = vmatpush.bf16.msra.mxu0 %v711
      %739 = vmatpush.bf16.msra.mxu0 %v709
      %740 = vmatpush.bf16.msra.mxu0 %v707
      %741 = vmatpush.bf16.msra.mxu0 %v705
      %742 = vmatpush.bf16.msra.mxu0 %v703
      %743 = vmatmul.bf16.gmra.mxu0 %v649
      %v744 = vpop.f32.mrf.mxu0
      %v745 = vadd.f32 %v651, %v744
      %v746 = vpop.f32.mrf.mxu0
      %747 = vdwg.mxu0
      %748 = vmatpush.bf16.msra.mxu0 %v718
      %749 = vmatpush.bf16.msra.mxu0 %v716
      %750 = vmatpush.bf16.msra.mxu0 %v714
      %751 = vmatpush.bf16.msra.mxu0 %v712
      %752 = vmatpush.bf16.msra.mxu0 %v710
      %753 = vmatpush.bf16.msra.mxu0 %v708
      %754 = vmatpush.bf16.msra.mxu0 %v706
      %755 = vmatpush.bf16.msra.mxu0 %v704
      %756 = vmatmul.bf16.gmra.mxu0 %v649
      %v757 = vpop.f32.mrf.mxu0
      %v758 = vadd.f32 %v652, %v757
      %v759 = vpop.f32.mrf.mxu0
      %760 = vdwg.mxu0
      %v761 = vmax.f32 %v745, 0.0
      %v762 = vmax.f32 %v758, 0.0
      %v763 = vld [vmem:[%s7] sm:$0xff]
      %v764 = vld [vmem:[%s7 + $0x8] sm:$0xff]
      %v765 = vld [vmem:[%s7 + $0x10] sm:$0xff]
      %v766 = vld [vmem:[%s7 + $0x18] sm:$0xff]
      %v767 = vld [vmem:[%s7 + $0x20] sm:$0xff]
      %v768 = vld [vmem:[%s7 + $0x28] sm:$0xff]
      %v769 = vld [vmem:[%s7 + $0x30] sm:$0xff]
      %v770 = vld [vmem:[%s7 + $0x38] sm:$0xff]
      %v771 = vld [vmem:[%s7 + $0x40] sm:$0xff]
      %v772 = vld [vmem:[%s7 + $0x48] sm:$0xff]
      %v773 = vld [vmem:[%s7 + $0x50] sm:$0xff]
      %v774 = vld [vmem:[%s7 + $0x58] sm:$0xff]
      %v775 = vld [vmem:[%s7 + $0x60] sm:$0xff]
      %v776 = vld [vmem:[%s7 + $0x68] sm:$0xff]
      %v777 = vld [vmem:[%s7 + $0x70] sm:$0xff]
      %v778 = vld [vmem:[%s7 + $0x78] sm:$0xff]
      %v779 = vld [vmem:[%s7 + $0x80] sm:$0xff]
      %v780 = vld [vmem:[%s7 + $0x88] sm:$0xff]
      %v781 = vld [vmem:[%s7 + $0x90] sm:$0xff]
      %v782 = vld [vmem:[%s7 + $0x98] sm:$0xff]
      %v783 = vld [vmem:[%s7 + $0xa0] sm:$0xff]
      %v784 = vld [vmem:[%s7 + $0xa8] sm:$0xff]
      %v785 = vld [vmem:[%s7 + $0xb0] sm:$0xff]
      %v786 = vld [vmem:[%s7 + $0xb8] sm:$0xff]
      %v787 = vld [vmem:[%s7 + $0xc0] sm:$0xff]
      %v788 = vld [vmem:[%s7 + $0xc8] sm:$0xff]
      %v789 = vld [vmem:[%s7 + $0xd0] sm:$0xff]
      %v790 = vld [vmem:[%s7 + $0xd8] sm:$0xff]
      %v791 = vld [vmem:[%s7 + $0xe0] sm:$0xff]
      %v792 = vld [vmem:[%s7 + $0xe8] sm:$0xff]
      %v793 = vld [vmem:[%s7 + $0xf0] sm:$0xff]
      %v794 = vld [vmem:[%s7 + $0xf8] sm:$0xff]
      %v795 = vld [vmem:[%s7 + $0x100] sm:$0xff]
      %v796 = vld [vmem:[%s7 + $0x108] sm:$0xff]
      %v797 = vld [vmem:[%s7 + $0x110] sm:$0xff]
      %v798 = vld [vmem:[%s7 + $0x118] sm:$0xff]
      %v799 = vld [vmem:[%s7 + $0x120] sm:$0xff]
      %v800 = vld [vmem:[%s7 + $0x128] sm:$0xff]
      %v801 = vld [vmem:[%s7 + $0x130] sm:$0xff]
      %v802 = vld [vmem:[%s7 + $0x138] sm:$0xff]
      %v803 = vld [vmem:[%s7 + $0x140] sm:$0xff]
      %v804 = vld [vmem:[%s7 + $0x148] sm:$0xff]
      %v805 = vld [vmem:[%s7 + $0x150] sm:$0xff]
      %v806 = vld [vmem:[%s7 + $0x158] sm:$0xff]
      %v807 = vld [vmem:[%s7 + $0x160] sm:$0xff]
      %v808 = vld [vmem:[%s7 + $0x168] sm:$0xff]
      %v809 = vld [vmem:[%s7 + $0x170] sm:$0xff]
      %v810 = vld [vmem:[%s7 + $0x178] sm:$0xff]
      %v811 = vld [vmem:[%s7 + $0x180] sm:$0xff]
      %v812 = vld [vmem:[%s7 + $0x188] sm:$0xff]
      %v813 = vld [vmem:[%s7 + $0x190] sm:$0xff]
      %v814 = vld [vmem:[%s7 + $0x198] sm:$0xff]
      %v815 = vld [vmem:[%s7 + $0x1a0] sm:$0xff]
      %v816 = vld [vmem:[%s7 + $0x1a8] sm:$0xff]
      %v817 = vld [vmem:[%s7 + $0x1b0] sm:$0xff]
      %v818 = vld [vmem:[%s7 + $0x1b8] sm:$0xff]
      %v819 = vld [vmem:[%s7 + $0x1c0] sm:$0xff]
      %v820 = vld [vmem:[%s7 + $0x1c8] sm:$0xff]
      %v821 = vld [vmem:[%s7 + $0x1d0] sm:$0xff]
      %v822 = vld [vmem:[%s7 + $0x1d8] sm:$0xff]
      %v823 = vld [vmem:[%s7 + $0x1e0] sm:$0xff]
      %v824 = vld [vmem:[%s7 + $0x1e8] sm:$0xff]
      %v825 = vld [vmem:[%s7 + $0x1f0] sm:$0xff]
      %v826 = vld [vmem:[%s7 + $0x1f8] sm:$0xff]
      %v827 = vld [vmem:[%s8] sm:$0xf]
      %v828 = vpack.c.bf16 %v761, %v761
      %v829 = vpack.c.bf16 %v762, %v762
      %v831 = vperm.slane %v827, 0
      %v832 = vperm.slane %v827, 1
      %v833 = vperm.slane %v827, 2
      %v834 = vperm.slane %v827, 3
      %v903 = vunpack.c.l.b16 %v763
      %v904 = vunpack.c.h.b16 %v763
      %v905 = vunpack.c.l.b16 %v764
      %v906 = vunpack.c.h.b16 %v764
      %v907 = vunpack.c.l.b16 %v765
      %v908 = vunpack.c.h.b16 %v765
      %v909 = vunpack.c.l.b16 %v766
      %v910 = vunpack.c.h.b16 %v766
      %v911 = vunpack.c.l.b16 %v767
      %v912 = vunpack.c.h.b16 %v767
      %v913 = vunpack.c.l.b16 %v768
      %v914 = vunpack.c.h.b16 %v768
      %v915 = vunpack.c.l.b16 %v769
      %v916 = vunpack.c.h.b16 %v769
      %v917 = vunpack.c.l.b16 %v770
      %v918 = vunpack.c.h.b16 %v770
      %v919 = vunpack.c.l.b16 %v771
      %v920 = vunpack.c.h.b16 %v771
      %v921 = vunpack.c.l.b16 %v772
      %v922 = vunpack.c.h.b16 %v772
      %v923 = vunpack.c.l.b16 %v773
      %v924 = vunpack.c.h.b16 %v773
      %v925 = vunpack.c.l.b16 %v774
      %v926 = vunpack.c.h.b16 %v774
      %v927 = vunpack.c.l.b16 %v775
      %v928 = vunpack.c.h.b16 %v775
      %v929 = vunpack.c.l.b16 %v776
      %v930 = vunpack.c.h.b16 %v776
      %v931 = vunpack.c.l.b16 %v777
      %v932 = vunpack.c.h.b16 %v777
      %v933 = vunpack.c.l.b16 %v778
      %v934 = vunpack.c.h.b16 %v778
      %v935 = vunpack.c.l.b16 %v779
      %v936 = vunpack.c.h.b16 %v779
      %v937 = vunpack.c.l.b16 %v780
      %v938 = vunpack.c.h.b16 %v780
      %v939 = vunpack.c.l.b16 %v781
      %v940 = vunpack.c.h.b16 %v781
      %v941 = vunpack.c.l.b16 %v782
      %v942 = vunpack.c.h.b16 %v782
      %v943 = vunpack.c.l.b16 %v783
      %v944 = vunpack.c.h.b16 %v783
      %v945 = vunpack.c.l.b16 %v784
      %v946 = vunpack.c.h.b16 %v784
      %v947 = vunpack.c.l.b16 %v785
      %v948 = vunpack.c.h.b16 %v785
      %v949 = vunpack.c.l.b16 %v786
      %v950 = vunpack.c.h.b16 %v786
      %v951 = vunpack.c.l.b16 %v787
      %v952 = vunpack.c.h.b16 %v787
      %v953 = vunpack.c.l.b16 %v788
      %v954 = vunpack.c.h.b16 %v788
      %v955 = vunpack.c.l.b16 %v789
      %v956 = vunpack.c.h.b16 %v789
      %v957 = vunpack.c.l.b16 %v790
      %v958 = vunpack.c.h.b16 %v790
      %v959 = vunpack.c.l.b16 %v791
      %v960 = vunpack.c.h.b16 %v791
      %v961 = vunpack.c.l.b16 %v792
      %v962 = vunpack.c.h.b16 %v792
      %v963 = vunpack.c.l.b16 %v793
      %v964 = vunpack.c.h.b16 %v793
      %v965 = vunpack.c.l.b16 %v794
      %v966 = vunpack.c.h.b16 %v794
      %v967 = vunpack.c.l.b16 %v795
      %v968 = vunpack.c.h.b16 %v795
      %v969 = vunpack.c.l.b16 %v796
      %v970 = vunpack.c.h.b16 %v796
      %v971 = vunpack.c.l.b16 %v797
      %v972 = vunpack.c.h.b16 %v797
      %v973 = vunpack.c.l.b16 %v798
      %v974 = vunpack.c.h.b16 %v798
      %v975 = vunpack.c.l.b16 %v799
      %v976 = vunpack.c.h.b16 %v799
      %v977 = vunpack.c.l.b16 %v800
      %v978 = vunpack.c.h.b16 %v800
      %v979 = vunpack.c.l.b16 %v801
      %v980 = vunpack.c.h.b16 %v801
      %v981 = vunpack.c.l.b16 %v802
      %v982 = vunpack.c.h.b16 %v802
      %v983 = vunpack.c.l.b16 %v803
      %v984 = vunpack.c.h.b16 %v803
      %v985 = vunpack.c.l.b16 %v804
      %v986 = vunpack.c.h.b16 %v804
      %v987 = vunpack.c.l.b16 %v805
      %v988 = vunpack.c.h.b16 %v805
      %v989 = vunpack.c.l.b16 %v806
      %v990 = vunpack.c.h.b16 %v806
      %v991 = vunpack.c.l.b16 %v807
      %v992 = vunpack.c.h.b16 %v807
      %v993 = vunpack.c.l.b16 %v808
      %v994 = vunpack.c.h.b16 %v808
      %v995 = vunpack.c.l.b16 %v809
      %v996 = vunpack.c.h.b16 %v809
      %v997 = vunpack.c.l.b16 %v810
      %v998 = vunpack.c.h.b16 %v810
      %v999 = vunpack.c.l.b16 %v811
      %v1000 = vunpack.c.h.b16 %v811
      %v1001 = vunpack.c.l.b16 %v812
      %v1002 = vunpack.c.h.b16 %v812
      %v1003 = vunpack.c.l.b16 %v813
      %v1004 = vunpack.c.h.b16 %v813
      %v1005 = vunpack.c.l.b16 %v814
      %v1006 = vunpack.c.h.b16 %v814
      %v1007 = vunpack.c.l.b16 %v815
      %v1008 = vunpack.c.h.b16 %v815
      %v1009 = vunpack.c.l.b16 %v816
      %v1010 = vunpack.c.h.b16 %v816
      %v1011 = vunpack.c.l.b16 %v817
      %v1012 = vunpack.c.h.b16 %v817
      %v1013 = vunpack.c.l.b16 %v818
      %v1014 = vunpack.c.h.b16 %v818
      %v1015 = vunpack.c.l.b16 %v819
      %v1016 = vunpack.c.h.b16 %v819
      %v1017 = vunpack.c.l.b16 %v820
      %v1018 = vunpack.c.h.b16 %v820
      %v1019 = vunpack.c.l.b16 %v821
      %v1020 = vunpack.c.h.b16 %v821
      %v1021 = vunpack.c.l.b16 %v822
      %v1022 = vunpack.c.h.b16 %v822
      %v1023 = vunpack.c.l.b16 %v823
      %v1024 = vunpack.c.h.b16 %v823
      %v1025 = vunpack.c.l.b16 %v824
      %v1026 = vunpack.c.h.b16 %v824
      %v1027 = vunpack.c.l.b16 %v825
      %v1028 = vunpack.c.h.b16 %v825
      %v1029 = vunpack.c.l.b16 %v826
      %v1030 = vunpack.c.h.b16 %v826
      %v1031 = vpack.c.b16 %v907, %v903
      %v1032 = vpack.c.b16 %v908, %v904
      %v1033 = vpack.c.b16 %v909, %v905
      %v1034 = vpack.c.b16 %v910, %v906
      %v1035 = vpack.c.b16 %v915, %v911
      %v1036 = vpack.c.b16 %v916, %v912
      %v1037 = vpack.c.b16 %v917, %v913
      %v1038 = vpack.c.b16 %v918, %v914
      %v1039 = vpack.c.b16 %v923, %v919
      %v1040 = vpack.c.b16 %v924, %v920
      %v1041 = vpack.c.b16 %v925, %v921
      %v1042 = vpack.c.b16 %v926, %v922
      %v1043 = vpack.c.b16 %v931, %v927
      %v1044 = vpack.c.b16 %v932, %v928
      %v1045 = vpack.c.b16 %v933, %v929
      %v1046 = vpack.c.b16 %v934, %v930
      %v1047 = vpack.c.b16 %v939, %v935
      %v1048 = vpack.c.b16 %v940, %v936
      %v1049 = vpack.c.b16 %v941, %v937
      %v1050 = vpack.c.b16 %v942, %v938
      %v1051 = vpack.c.b16 %v947, %v943
      %v1052 = vpack.c.b16 %v948, %v944
      %v1053 = vpack.c.b16 %v949, %v945
      %v1054 = vpack.c.b16 %v950, %v946
      %v1055 = vpack.c.b16 %v955, %v951
      %v1056 = vpack.c.b16 %v956, %v952
      %v1057 = vpack.c.b16 %v957, %v953
      %v1058 = vpack.c.b16 %v958, %v954
      %v1059 = vpack.c.b16 %v963, %v959
      %v1060 = vpack.c.b16 %v964, %v960
      %v1061 = vpack.c.b16 %v965, %v961
      %v1062 = vpack.c.b16 %v966, %v962
      %v1063 = vpack.c.b16 %v971, %v967
      %v1064 = vpack.c.b16 %v972, %v968
      %v1065 = vpack.c.b16 %v973, %v969
      %v1066 = vpack.c.b16 %v974, %v970
      %v1067 = vpack.c.b16 %v979, %v975
      %v1068 = vpack.c.b16 %v980, %v976
      %v1069 = vpack.c.b16 %v981, %v977
      %v1070 = vpack.c.b16 %v982, %v978
      %v1071 = vpack.c.b16 %v987, %v983
      %v1072 = vpack.c.b16 %v988, %v984
      %v1073 = vpack.c.b16 %v989, %v985
      %v1074 = vpack.c.b16 %v990, %v986
      %v1075 = vpack.c.b16 %v995, %v991
      %v1076 = vpack.c.b16 %v996, %v992
      %v1077 = vpack.c.b16 %v997, %v993
      %v1078 = vpack.c.b16 %v998, %v994
      %v1079 = vpack.c.b16 %v1003, %v999
      %v1080 = vpack.c.b16 %v1004, %v1000
      %v1081 = vpack.c.b16 %v1005, %v1001
      %v1082 = vpack.c.b16 %v1006, %v1002
      %v1083 = vpack.c.b16 %v1011, %v1007
      %v1084 = vpack.c.b16 %v1012, %v1008
      %v1085 = vpack.c.b16 %v1013, %v1009
      %v1086 = vpack.c.b16 %v1014, %v1010
      %v1087 = vpack.c.b16 %v1019, %v1015
      %v1088 = vpack.c.b16 %v1020, %v1016
      %v1089 = vpack.c.b16 %v1021, %v1017
      %v1090 = vpack.c.b16 %v1022, %v1018
      %v1091 = vpack.c.b16 %v1027, %v1023
      %v1092 = vpack.c.b16 %v1028, %v1024
      %v1093 = vpack.c.b16 %v1029, %v1025
      %v1094 = vpack.c.b16 %v1030, %v1026
      %1159 = vmatpush.bf16.msra.mxu0 %v1059
      %1160 = vmatpush.bf16.msra.mxu0 %v1055
      %1161 = vmatpush.bf16.msra.mxu0 %v1051
      %1162 = vmatpush.bf16.msra.mxu0 %v1047
      %1163 = vmatpush.bf16.msra.mxu0 %v1043
      %1164 = vmatpush.bf16.msra.mxu0 %v1039
      %1165 = vmatpush.bf16.msra.mxu0 %v1035
      %1166 = vmatpush.bf16.msra.mxu0 %v1031
      %1167 = vmatmul.bf16.gmra.mxu0 %v828
      %v1168 = vpop.f32.mrf.mxu0
      %v1169 = vadd.f32 %v831, %v1168
      %v1170 = vpop.f32.mrf.mxu0
      %1171 = vdwg.mxu0
      %1172 = vmatpush.bf16.msra.mxu0 %v1091
      %1173 = vmatpush.bf16.msra.mxu0 %v1087
      %1174 = vmatpush.bf16.msra.mxu0 %v1083
      %1175 = vmatpush.bf16.msra.mxu0 %v1079
      %1176 = vmatpush.bf16.msra.mxu0 %v1075
      %1177 = vmatpush.bf16.msra.mxu0 %v1071
      %1178 = vmatpush.bf16.msra.mxu0 %v1067
      %1179 = vmatpush.bf16.msra.mxu0 %v1063
      %1180 = vmatmul.bf16.gmra.mxu0 %v829
      %v1181 = vpop.f32.mrf.mxu0
      %v1182 = vadd.f32 %v1169, %v1181
      %v1183 = vpop.f32.mrf.mxu0
      %1184 = vdwg.mxu0
      %1185 = vmatpush.bf16.msra.mxu0 %v1060
      %1186 = vmatpush.bf16.msra.mxu0 %v1056
      %1187 = vmatpush.bf16.msra.mxu0 %v1052
      %1188 = vmatpush.bf16.msra.mxu0 %v1048
      %1189 = vmatpush.bf16.msra.mxu0 %v1044
      %1190 = vmatpush.bf16.msra.mxu0 %v1040
      %1191 = vmatpush.bf16.msra.mxu0 %v1036
      %1192 = vmatpush.bf16.msra.mxu0 %v1032
      %1193 = vmatmul.bf16.gmra.mxu0 %v828
      %v1194 = vpop.f32.mrf.mxu0
      %v1195 = vadd.f32 %v832, %v1194
      %v1196 = vpop.f32.mrf.mxu0
      %1197 = vdwg.mxu0
      %1198 = vmatpush.bf16.msra.mxu0 %v1092
      %1199 = vmatpush.bf16.msra.mxu0 %v1088
      %1200 = vmatpush.bf16.msra.mxu0 %v1084
      %1201 = vmatpush.bf16.msra.mxu0 %v1080
      %1202 = vmatpush.bf16.msra.mxu0 %v1076
      %1203 = vmatpush.bf16.msra.mxu0 %v1072
      %1204 = vmatpush.bf16.msra.mxu0 %v1068
      %1205 = vmatpush.bf16.msra.mxu0 %v1064
      %1206 = vmatmul.bf16.gmra.mxu0 %v829
      %v1207 = vpop.f32.mrf.mxu0
      %v1208 = vadd.f32 %v1195, %v1207
      %v1209 = vpop.f32.mrf.mxu0
      %1210 = vdwg.mxu0
      %1211 = vmatpush.bf16.msra.mxu0 %v1061
      %1212 = vmatpush.bf16.msra.mxu0 %v1057
      %1213 = vmatpush.bf16.msra.mxu0 %v1053
      %1214 = vmatpush.bf16.msra.mxu0 %v1049
      %1215 = vmatpush.bf16.msra.mxu0 %v1045
      %1216 = vmatpush.bf16.msra.mxu0 %v1041
      %1217 = vmatpush.bf16.msra.mxu0 %v1037
      %1218 = vmatpush.bf16.msra.mxu0 %v1033
      %1219 = vmatmul.bf16.gmra.mxu0 %v828
      %v1220 = vpop.f32.mrf.mxu0
      %v1221 = vadd.f32 %v833, %v1220
      %v1222 = vpop.f32.mrf.mxu0
      %1223 = vdwg.mxu0
      %1224 = vmatpush.bf16.msra.mxu0 %v1093
      %1225 = vmatpush.bf16.msra.mxu0 %v1089
      %1226 = vmatpush.bf16.msra.mxu0 %v1085
      %1227 = vmatpush.bf16.msra.mxu0 %v1081
      %1228 = vmatpush.bf16.msra.mxu0 %v1077
      %1229 = vmatpush.bf16.msra.mxu0 %v1073
      %1230 = vmatpush.bf16.msra.mxu0 %v1069
      %1231 = vmatpush.bf16.msra.mxu0 %v1065
      %1232 = vmatmul.bf16.gmra.mxu0 %v829
      %v1233 = vpop.f32.mrf.mxu0
      %v1234 = vadd.f32 %v1221, %v1233
      %v1235 = vpop.f32.mrf.mxu0
      %1236 = vdwg.mxu0
      %1237 = vmatpush.bf16.msra.mxu0 %v1062
      %1238 = vmatpush.bf16.msra.mxu0 %v1058
      %1239 = vmatpush.bf16.msra.mxu0 %v1054
      %1240 = vmatpush.bf16.msra.mxu0 %v1050
      %1241 = vmatpush.bf16.msra.mxu0 %v1046
      %1242 = vmatpush.bf16.msra.mxu0 %v1042
      %1243 = vmatpush.bf16.msra.mxu0 %v1038
      %1244 = vmatpush.bf16.msra.mxu0 %v1034
      %1245 = vmatmul.bf16.gmra.mxu0 %v828
      %v1246 = vpop.f32.mrf.mxu0
      %v1247 = vadd.f32 %v834, %v1246
      %v1248 = vpop.f32.mrf.mxu0
      %1249 = vdwg.mxu0
      %1250 = vmatpush.bf16.msra.mxu0 %v1094
      %1251 = vmatpush.bf16.msra.mxu0 %v1090
      %1252 = vmatpush.bf16.msra.mxu0 %v1086
      %1253 = vmatpush.bf16.msra.mxu0 %v1082
      %1254 = vmatpush.bf16.msra.mxu0 %v1078
      %1255 = vmatpush.bf16.msra.mxu0 %v1074
      %1256 = vmatpush.bf16.msra.mxu0 %v1070
      %1257 = vmatpush.bf16.msra.mxu0 %v1066
      %1258 = vmatmul.bf16.gmra.mxu0 %v829
      %v1259 = vpop.f32.mrf.mxu0
      %v1260 = vadd.f32 %v1247, %v1259
      %v1261 = vpop.f32.mrf.mxu0
      %1262 = vdwg.mxu0
      %vm1263 = vcmp.gt.f32.partialorder %v1182, 0.0
      %vm1264 = vcmp.gt.f32.partialorder %v1208, 0.0
      %vm1265 = vcmp.gt.f32.partialorder %v1234, 0.0
      %vm1266 = vcmp.gt.f32.partialorder %v1260, 0.0
      %v1267 = vmul.f32 %v1182, 0.01
      %v1268 = vmul.f32 %v1208, 0.01
      %v1269 = vmul.f32 %v1234, 0.01
      %v1270 = vmul.f32 %v1260, 0.01
      %v1271 = vsel %vm1263, %v1182, %v1267
      %v1272 = vsel %vm1264, %v1208, %v1268
      %v1273 = vsel %vm1265, %v1234, %v1269
      %v1274 = vsel %vm1266, %v1260, %v1270
      %v1275 = vld [vmem:[%s9] sm:$0xff]
      %v1276 = vld [vmem:[%s9 + $0x8] sm:$0xff]
      %v1277 = vld [vmem:[%s9 + $0x10] sm:$0xff]
      %v1278 = vld [vmem:[%s9 + $0x18] sm:$0xff]
      %v1279 = vld [vmem:[%s9 + $0x20] sm:$0xff]
      %v1280 = vld [vmem:[%s9 + $0x28] sm:$0xff]
      %v1281 = vld [vmem:[%s9 + $0x30] sm:$0xff]
      %v1282 = vld [vmem:[%s9 + $0x38] sm:$0xff]
      %v1283 = vld [vmem:[%s9 + $0x40] sm:$0xff]
      %v1284 = vld [vmem:[%s9 + $0x48] sm:$0xff]
      %v1285 = vld [vmem:[%s9 + $0x50] sm:$0xff]
      %v1286 = vld [vmem:[%s9 + $0x58] sm:$0xff]
      %v1287 = vld [vmem:[%s9 + $0x60] sm:$0xff]
      %v1288 = vld [vmem:[%s9 + $0x68] sm:$0xff]
      %v1289 = vld [vmem:[%s9 + $0x70] sm:$0xff]
      %v1290 = vld [vmem:[%s9 + $0x78] sm:$0xff]
      %v1291 = vld [vmem:[%s9 + $0x80] sm:$0xff]
      %v1292 = vld [vmem:[%s9 + $0x88] sm:$0xff]
      %v1293 = vld [vmem:[%s9 + $0x90] sm:$0xff]
      %v1294 = vld [vmem:[%s9 + $0x98] sm:$0xff]
      %v1295 = vld [vmem:[%s9 + $0xa0] sm:$0xff]
      %v1296 = vld [vmem:[%s9 + $0xa8] sm:$0xff]
      %v1297 = vld [vmem:[%s9 + $0xb0] sm:$0xff]
      %v1298 = vld [vmem:[%s9 + $0xb8] sm:$0xff]
      %v1299 = vld [vmem:[%s9 + $0xc0] sm:$0xff]
      %v1300 = vld [vmem:[%s9 + $0xc8] sm:$0xff]
      %v1301 = vld [vmem:[%s9 + $0xd0] sm:$0xff]
      %v1302 = vld [vmem:[%s9 + $0xd8] sm:$0xff]
      %v1303 = vld [vmem:[%s9 + $0xe0] sm:$0xff]
      %v1304 = vld [vmem:[%s9 + $0xe8] sm:$0xff]
      %v1305 = vld [vmem:[%s9 + $0xf0] sm:$0xff]
      %v1306 = vld [vmem:[%s9 + $0xf8] sm:$0xff]
      %v1307 = vld [vmem:[%s9 + $0x100] sm:$0xff]
      %v1308 = vld [vmem:[%s9 + $0x108] sm:$0xff]
      %v1309 = vld [vmem:[%s9 + $0x110] sm:$0xff]
      %v1310 = vld [vmem:[%s9 + $0x118] sm:$0xff]
      %v1311 = vld [vmem:[%s9 + $0x120] sm:$0xff]
      %v1312 = vld [vmem:[%s9 + $0x128] sm:$0xff]
      %v1313 = vld [vmem:[%s9 + $0x130] sm:$0xff]
      %v1314 = vld [vmem:[%s9 + $0x138] sm:$0xff]
      %v1315 = vld [vmem:[%s9 + $0x140] sm:$0xff]
      %v1316 = vld [vmem:[%s9 + $0x148] sm:$0xff]
      %v1317 = vld [vmem:[%s9 + $0x150] sm:$0xff]
      %v1318 = vld [vmem:[%s9 + $0x158] sm:$0xff]
      %v1319 = vld [vmem:[%s9 + $0x160] sm:$0xff]
      %v1320 = vld [vmem:[%s9 + $0x168] sm:$0xff]
      %v1321 = vld [vmem:[%s9 + $0x170] sm:$0xff]
      %v1322 = vld [vmem:[%s9 + $0x178] sm:$0xff]
      %v1323 = vld [vmem:[%s9 + $0x180] sm:$0xff]
      %v1324 = vld [vmem:[%s9 + $0x188] sm:$0xff]
      %v1325 = vld [vmem:[%s9 + $0x190] sm:$0xff]
      %v1326 = vld [vmem:[%s9 + $0x198] sm:$0xff]
      %v1327 = vld [vmem:[%s9 + $0x1a0] sm:$0xff]
      %v1328 = vld [vmem:[%s9 + $0x1a8] sm:$0xff]
      %v1329 = vld [vmem:[%s9 + $0x1b0] sm:$0xff]
      %v1330 = vld [vmem:[%s9 + $0x1b8] sm:$0xff]
      %v1331 = vld [vmem:[%s9 + $0x1c0] sm:$0xff]
      %v1332 = vld [vmem:[%s9 + $0x1c8] sm:$0xff]
      %v1333 = vld [vmem:[%s9 + $0x1d0] sm:$0xff]
      %v1334 = vld [vmem:[%s9 + $0x1d8] sm:$0xff]
      %v1335 = vld [vmem:[%s9 + $0x1e0] sm:$0xff]
      %v1336 = vld [vmem:[%s9 + $0x1e8] sm:$0xff]
      %v1337 = vld [vmem:[%s9 + $0x1f0] sm:$0xff]
      %v1338 = vld [vmem:[%s9 + $0x1f8] sm:$0xff]
      %v1339 = vld [vmem:[%s10] sm:$0x3]
      %v1340 = vpack.c.bf16 %v1271, %v1271
      %v1341 = vpack.c.bf16 %v1272, %v1272
      %v1342 = vpack.c.bf16 %v1273, %v1273
      %v1343 = vpack.c.bf16 %v1274, %v1274
      %v1345 = vperm.slane %v1339, 0
      %v1346 = vperm.slane %v1339, 1
      %v1413 = vunpack.c.l.b16 %v1275
      %v1414 = vunpack.c.h.b16 %v1275
      %v1415 = vunpack.c.l.b16 %v1276
      %v1416 = vunpack.c.h.b16 %v1276
      %v1417 = vunpack.c.l.b16 %v1277
      %v1418 = vunpack.c.h.b16 %v1277
      %v1419 = vunpack.c.l.b16 %v1278
      %v1420 = vunpack.c.h.b16 %v1278
      %v1421 = vunpack.c.l.b16 %v1279
      %v1422 = vunpack.c.h.b16 %v1279
      %v1423 = vunpack.c.l.b16 %v1280
      %v1424 = vunpack.c.h.b16 %v1280
      %v1425 = vunpack.c.l.b16 %v1281
      %v1426 = vunpack.c.h.b16 %v1281
      %v1427 = vunpack.c.l.b16 %v1282
      %v1428 = vunpack.c.h.b16 %v1282
      %v1429 = vunpack.c.l.b16 %v1283
      %v1430 = vunpack.c.h.b16 %v1283
      %v1431 = vunpack.c.l.b16 %v1284
      %v1432 = vunpack.c.h.b16 %v1284
      %v1433 = vunpack.c.l.b16 %v1285
      %v1434 = vunpack.c.h.b16 %v1285
      %v1435 = vunpack.c.l.b16 %v1286
      %v1436 = vunpack.c.h.b16 %v1286
      %v1437 = vunpack.c.l.b16 %v1287
      %v1438 = vunpack.c.h.b16 %v1287
      %v1439 = vunpack.c.l.b16 %v1288
      %v1440 = vunpack.c.h.b16 %v1288
      %v1441 = vunpack.c.l.b16 %v1289
      %v1442 = vunpack.c.h.b16 %v1289
      %v1443 = vunpack.c.l.b16 %v1290
      %v1444 = vunpack.c.h.b16 %v1290
      %v1445 = vunpack.c.l.b16 %v1291
      %v1446 = vunpack.c.h.b16 %v1291
      %v1447 = vunpack.c.l.b16 %v1292
      %v1448 = vunpack.c.h.b16 %v1292
      %v1449 = vunpack.c.l.b16 %v1293
      %v1450 = vunpack.c.h.b16 %v1293
      %v1451 = vunpack.c.l.b16 %v1294
      %v1452 = vunpack.c.h.b16 %v1294
      %v1453 = vunpack.c.l.b16 %v1295
      %v1454 = vunpack.c.h.b16 %v1295
      %v1455 = vunpack.c.l.b16 %v1296
      %v1456 = vunpack.c.h.b16 %v1296
      %v1457 = vunpack.c.l.b16 %v1297
      %v1458 = vunpack.c.h.b16 %v1297
      %v1459 = vunpack.c.l.b16 %v1298
      %v1460 = vunpack.c.h.b16 %v1298
      %v1461 = vunpack.c.l.b16 %v1299
      %v1462 = vunpack.c.h.b16 %v1299
      %v1463 = vunpack.c.l.b16 %v1300
      %v1464 = vunpack.c.h.b16 %v1300
      %v1465 = vunpack.c.l.b16 %v1301
      %v1466 = vunpack.c.h.b16 %v1301
      %v1467 = vunpack.c.l.b16 %v1302
      %v1468 = vunpack.c.h.b16 %v1302
      %v1469 = vunpack.c.l.b16 %v1303
      %v1470 = vunpack.c.h.b16 %v1303
      %v1471 = vunpack.c.l.b16 %v1304
      %v1472 = vunpack.c.h.b16 %v1304
      %v1473 = vunpack.c.l.b16 %v1305
      %v1474 = vunpack.c.h.b16 %v1305
      %v1475 = vunpack.c.l.b16 %v1306
      %v1476 = vunpack.c.h.b16 %v1306
      %v1477 = vunpack.c.l.b16 %v1307
      %v1478 = vunpack.c.h.b16 %v1307
      %v1479 = vunpack.c.l.b16 %v1308
      %v1480 = vunpack.c.h.b16 %v1308
      %v1481 = vunpack.c.l.b16 %v1309
      %v1482 = vunpack.c.h.b16 %v1309
      %v1483 = vunpack.c.l.b16 %v1310
      %v1484 = vunpack.c.h.b16 %v1310
      %v1485 = vunpack.c.l.b16 %v1311
      %v1486 = vunpack.c.h.b16 %v1311
      %v1487 = vunpack.c.l.b16 %v1312
      %v1488 = vunpack.c.h.b16 %v1312
      %v1489 = vunpack.c.l.b16 %v1313
      %v1490 = vunpack.c.h.b16 %v1313
      %v1491 = vunpack.c.l.b16 %v1314
      %v1492 = vunpack.c.h.b16 %v1314
      %v1493 = vunpack.c.l.b16 %v1315
      %v1494 = vunpack.c.h.b16 %v1315
      %v1495 = vunpack.c.l.b16 %v1316
      %v1496 = vunpack.c.h.b16 %v1316
      %v1497 = vunpack.c.l.b16 %v1317
      %v1498 = vunpack.c.h.b16 %v1317
      %v1499 = vunpack.c.l.b16 %v1318
      %v1500 = vunpack.c.h.b16 %v1318
      %v1501 = vunpack.c.l.b16 %v1319
      %v1502 = vunpack.c.h.b16 %v1319
      %v1503 = vunpack.c.l.b16 %v1320
      %v1504 = vunpack.c.h.b16 %v1320
      %v1505 = vunpack.c.l.b16 %v1321
      %v1506 = vunpack.c.h.b16 %v1321
      %v1507 = vunpack.c.l.b16 %v1322
      %v1508 = vunpack.c.h.b16 %v1322
      %v1509 = vunpack.c.l.b16 %v1323
      %v1510 = vunpack.c.h.b16 %v1323
      %v1511 = vunpack.c.l.b16 %v1324
      %v1512 = vunpack.c.h.b16 %v1324
      %v1513 = vunpack.c.l.b16 %v1325
      %v1514 = vunpack.c.h.b16 %v1325
      %v1515 = vunpack.c.l.b16 %v1326
      %v1516 = vunpack.c.h.b16 %v1326
      %v1517 = vunpack.c.l.b16 %v1327
      %v1518 = vunpack.c.h.b16 %v1327
      %v1519 = vunpack.c.l.b16 %v1328
      %v1520 = vunpack.c.h.b16 %v1328
      %v1521 = vunpack.c.l.b16 %v1329
      %v1522 = vunpack.c.h.b16 %v1329
      %v1523 = vunpack.c.l.b16 %v1330
      %v1524 = vunpack.c.h.b16 %v1330
      %v1525 = vunpack.c.l.b16 %v1331
      %v1526 = vunpack.c.h.b16 %v1331
      %v1527 = vunpack.c.l.b16 %v1332
      %v1528 = vunpack.c.h.b16 %v1332
      %v1529 = vunpack.c.l.b16 %v1333
      %v1530 = vunpack.c.h.b16 %v1333
      %v1531 = vunpack.c.l.b16 %v1334
      %v1532 = vunpack.c.h.b16 %v1334
      %v1533 = vunpack.c.l.b16 %v1335
      %v1534 = vunpack.c.h.b16 %v1335
      %v1535 = vunpack.c.l.b16 %v1336
      %v1536 = vunpack.c.h.b16 %v1336
      %v1537 = vunpack.c.l.b16 %v1337
      %v1538 = vunpack.c.h.b16 %v1337
      %v1539 = vunpack.c.l.b16 %v1338
      %v1540 = vunpack.c.h.b16 %v1338
      %v1541 = vpack.c.b16 %v1415, %v1413
      %v1542 = vpack.c.b16 %v1416, %v1414
      %v1543 = vpack.c.b16 %v1419, %v1417
      %v1544 = vpack.c.b16 %v1420, %v1418
      %v1545 = vpack.c.b16 %v1423, %v1421
      %v1546 = vpack.c.b16 %v1424, %v1422
      %v1547 = vpack.c.b16 %v1427, %v1425
      %v1548 = vpack.c.b16 %v1428, %v1426
      %v1549 = vpack.c.b16 %v1431, %v1429
      %v1550 = vpack.c.b16 %v1432, %v1430
      %v1551 = vpack.c.b16 %v1435, %v1433
      %v1552 = vpack.c.b16 %v1436, %v1434
      %v1553 = vpack.c.b16 %v1439, %v1437
      %v1554 = vpack.c.b16 %v1440, %v1438
      %v1555 = vpack.c.b16 %v1443, %v1441
      %v1556 = vpack.c.b16 %v1444, %v1442
      %v1557 = vpack.c.b16 %v1447, %v1445
      %v1558 = vpack.c.b16 %v1448, %v1446
      %v1559 = vpack.c.b16 %v1451, %v1449
      %v1560 = vpack.c.b16 %v1452, %v1450
      %v1561 = vpack.c.b16 %v1455, %v1453
      %v1562 = vpack.c.b16 %v1456, %v1454
      %v1563 = vpack.c.b16 %v1459, %v1457
      %v1564 = vpack.c.b16 %v1460, %v1458
      %v1565 = vpack.c.b16 %v1463, %v1461
      %v1566 = vpack.c.b16 %v1464, %v1462
      %v1567 = vpack.c.b16 %v1467, %v1465
      %v1568 = vpack.c.b16 %v1468, %v1466
      %v1569 = vpack.c.b16 %v1471, %v1469
      %v1570 = vpack.c.b16 %v1472, %v1470
      %v1571 = vpack.c.b16 %v1475, %v1473
      %v1572 = vpack.c.b16 %v1476, %v1474
      %v1573 = vpack.c.b16 %v1479, %v1477
      %v1574 = vpack.c.b16 %v1480, %v1478
      %v1575 = vpack.c.b16 %v1483, %v1481
      %v1576 = vpack.c.b16 %v1484, %v1482
      %v1577 = vpack.c.b16 %v1487, %v1485
      %v1578 = vpack.c.b16 %v1488, %v1486
      %v1579 = vpack.c.b16 %v1491, %v1489
      %v1580 = vpack.c.b16 %v1492, %v1490
      %v1581 = vpack.c.b16 %v1495, %v1493
      %v1582 = vpack.c.b16 %v1496, %v1494
      %v1583 = vpack.c.b16 %v1499, %v1497
      %v1584 = vpack.c.b16 %v1500, %v1498
      %v1585 = vpack.c.b16 %v1503, %v1501
      %v1586 = vpack.c.b16 %v1504, %v1502
      %v1587 = vpack.c.b16 %v1507, %v1505
      %v1588 = vpack.c.b16 %v1508, %v1506
      %v1589 = vpack.c.b16 %v1511, %v1509
      %v1590 = vpack.c.b16 %v1512, %v1510
      %v1591 = vpack.c.b16 %v1515, %v1513
      %v1592 = vpack.c.b16 %v1516, %v1514
      %v1593 = vpack.c.b16 %v1519, %v1517
      %v1594 = vpack.c.b16 %v1520, %v1518
      %v1595 = vpack.c.b16 %v1523, %v1521
      %v1596 = vpack.c.b16 %v1524, %v1522
      %v1597 = vpack.c.b16 %v1527, %v1525
      %v1598 = vpack.c.b16 %v1528, %v1526
      %v1599 = vpack.c.b16 %v1531, %v1529
      %v1600 = vpack.c.b16 %v1532, %v1530
      %v1601 = vpack.c.b16 %v1535, %v1533
      %v1602 = vpack.c.b16 %v1536, %v1534
      %v1603 = vpack.c.b16 %v1539, %v1537
      %v1604 = vpack.c.b16 %v1540, %v1538
      %1669 = vmatpush.bf16.msra.mxu0 %v1555
      %1670 = vmatpush.bf16.msra.mxu0 %v1553
      %1671 = vmatpush.bf16.msra.mxu0 %v1551
      %1672 = vmatpush.bf16.msra.mxu0 %v1549
      %1673 = vmatpush.bf16.msra.mxu0 %v1547
      %1674 = vmatpush.bf16.msra.mxu0 %v1545
      %1675 = vmatpush.bf16.msra.mxu0 %v1543
      %1676 = vmatpush.bf16.msra.mxu0 %v1541
      %1677 = vmatmul.bf16.gmra.mxu0 %v1340
      %v1678 = vpop.f32.mrf.mxu0
      %v1679 = vadd.f32 %v1345, %v1678
      %v1680 = vpop.f32.mrf.mxu0
      %1681 = vdwg.mxu0
      %1682 = vmatpush.bf16.msra.mxu0 %v1571
      %1683 = vmatpush.bf16.msra.mxu0 %v1569
      %1684 = vmatpush.bf16.msra.mxu0 %v1567
      %1685 = vmatpush.bf16.msra.mxu0 %v1565
      %1686 = vmatpush.bf16.msra.mxu0 %v1563
      %1687 = vmatpush.bf16.msra.mxu0 %v1561
      %1688 = vmatpush.bf16.msra.mxu0 %v1559
      %1689 = vmatpush.bf16.msra.mxu0 %v1557
      %1690 = vmatmul.bf16.gmra.mxu0 %v1341
      %v1691 = vpop.f32.mrf.mxu0
      %v1692 = vadd.f32 %v1679, %v1691
      %v1693 = vpop.f32.mrf.mxu0
      %1694 = vdwg.mxu0
      %1695 = vmatpush.bf16.msra.mxu0 %v1587
      %1696 = vmatpush.bf16.msra.mxu0 %v1585
      %1697 = vmatpush.bf16.msra.mxu0 %v1583
      %1698 = vmatpush.bf16.msra.mxu0 %v1581
      %1699 = vmatpush.bf16.msra.mxu0 %v1579
      %1700 = vmatpush.bf16.msra.mxu0 %v1577
      %1701 = vmatpush.bf16.msra.mxu0 %v1575
      %1702 = vmatpush.bf16.msra.mxu0 %v1573
      %1703 = vmatmul.bf16.gmra.mxu0 %v1342
      %v1704 = vpop.f32.mrf.mxu0
      %v1705 = vadd.f32 %v1692, %v1704
      %v1706 = vpop.f32.mrf.mxu0
      %1707 = vdwg.mxu0
      %1708 = vmatpush.bf16.msra.mxu0 %v1603
      %1709 = vmatpush.bf16.msra.mxu0 %v1601
      %1710 = vmatpush.bf16.msra.mxu0 %v1599
      %1711 = vmatpush.bf16.msra.mxu0 %v1597
      %1712 = vmatpush.bf16.msra.mxu0 %v1595
      %1713 = vmatpush.bf16.msra.mxu0 %v1593
      %1714 = vmatpush.bf16.msra.mxu0 %v1591
      %1715 = vmatpush.bf16.msra.mxu0 %v1589
      %1716 = vmatmul.bf16.gmra.mxu0 %v1343
      %v1717 = vpop.f32.mrf.mxu0
      %v1718 = vadd.f32 %v1705, %v1717
      %v1719 = vpop.f32.mrf.mxu0
      %1720 = vdwg.mxu0
      %1721 = vmatpush.bf16.msra.mxu0 %v1556
      %1722 = vmatpush.bf16.msra.mxu0 %v1554
      %1723 = vmatpush.bf16.msra.mxu0 %v1552
      %1724 = vmatpush.bf16.msra.mxu0 %v1550
      %1725 = vmatpush.bf16.msra.mxu0 %v1548
      %1726 = vmatpush.bf16.msra.mxu0 %v1546
      %1727 = vmatpush.bf16.msra.mxu0 %v1544
      %1728 = vmatpush.bf16.msra.mxu0 %v1542
      %1729 = vmatmul.bf16.gmra.mxu0 %v1340
      %v1730 = vpop.f32.mrf.mxu0
      %v1731 = vadd.f32 %v1346, %v1730
      %v1732 = vpop.f32.mrf.mxu0
      %1733 = vdwg.mxu0
      %1734 = vmatpush.bf16.msra.mxu0 %v1572
      %1735 = vmatpush.bf16.msra.mxu0 %v1570
      %1736 = vmatpush.bf16.msra.mxu0 %v1568
      %1737 = vmatpush.bf16.msra.mxu0 %v1566
      %1738 = vmatpush.bf16.msra.mxu0 %v1564
      %1739 = vmatpush.bf16.msra.mxu0 %v1562
      %1740 = vmatpush.bf16.msra.mxu0 %v1560
      %1741 = vmatpush.bf16.msra.mxu0 %v1558
      %1742 = vmatmul.bf16.gmra.mxu0 %v1341
      %v1743 = vpop.f32.mrf.mxu0
      %v1744 = vadd.f32 %v1731, %v1743
      %v1745 = vpop.f32.mrf.mxu0
      %1746 = vdwg.mxu0
      %1747 = vmatpush.bf16.msra.mxu0 %v1588
      %1748 = vmatpush.bf16.msra.mxu0 %v1586
      %1749 = vmatpush.bf16.msra.mxu0 %v1584
      %1750 = vmatpush.bf16.msra.mxu0 %v1582
      %1751 = vmatpush.bf16.msra.mxu0 %v1580
      %1752 = vmatpush.bf16.msra.mxu0 %v1578
      %1753 = vmatpush.bf16.msra.mxu0 %v1576
      %1754 = vmatpush.bf16.msra.mxu0 %v1574
      %1755 = vmatmul.bf16.gmra.mxu0 %v1342
      %v1756 = vpop.f32.mrf.mxu0
      %v1757 = vadd.f32 %v1744, %v1756
      %v1758 = vpop.f32.mrf.mxu0
      %1759 = vdwg.mxu0
      %1760 = vmatpush.bf16.msra.mxu0 %v1604
      %1761 = vmatpush.bf16.msra.mxu0 %v1602
      %1762 = vmatpush.bf16.msra.mxu0 %v1600
      %1763 = vmatpush.bf16.msra.mxu0 %v1598
      %1764 = vmatpush.bf16.msra.mxu0 %v1596
      %1765 = vmatpush.bf16.msra.mxu0 %v1594
      %1766 = vmatpush.bf16.msra.mxu0 %v1592
      %1767 = vmatpush.bf16.msra.mxu0 %v1590
      %1768 = vmatmul.bf16.gmra.mxu0 %v1343
      %v1769 = vpop.f32.mrf.mxu0
      %v1770 = vadd.f32 %v1757, %v1769
      %v1771 = vpop.f32.mrf.mxu0
      %1772 = vdwg.mxu0
      %vm1773 = vcmp.gt.f32.partialorder %v1718, 0.0
      %vm1774 = vcmp.gt.f32.partialorder %v1770, 0.0
      %v1775 = vmul.f32 %v1718, 0.01
      %v1776 = vmul.f32 %v1770, 0.01
      %v1777 = vsel %vm1773, %v1718, %v1775
      %v1778 = vsel %vm1774, %v1770, %v1776
      %v1779 = vld [vmem:[%s11] sm:$0xf]
      %v1780 = vld [vmem:[%s11 + $0x4] sm:$0xf]
      %v1781 = vld [vmem:[%s11 + $0x8] sm:$0xf]
      %v1782 = vld [vmem:[%s11 + $0xc] sm:$0xf]
      %v1783 = vld [vmem:[%s11 + $0x10] sm:$0xf]
      %v1784 = vld [vmem:[%s11 + $0x14] sm:$0xf]
      %v1785 = vld [vmem:[%s11 + $0x18] sm:$0xf]
      %v1786 = vld [vmem:[%s11 + $0x1c] sm:$0xf]
      %v1787 = vld [vmem:[%s11 + $0x20] sm:$0xf]
      %v1788 = vld [vmem:[%s11 + $0x24] sm:$0xf]
      %v1789 = vld [vmem:[%s11 + $0x28] sm:$0xf]
      %v1790 = vld [vmem:[%s11 + $0x2c] sm:$0xf]
      %v1791 = vld [vmem:[%s11 + $0x30] sm:$0xf]
      %v1792 = vld [vmem:[%s11 + $0x34] sm:$0xf]
      %v1793 = vld [vmem:[%s11 + $0x38] sm:$0xf]
      %v1794 = vld [vmem:[%s11 + $0x3c] sm:$0xf]
      %v1795 = vld [vmem:[%s11 + $0x40] sm:$0xf]
      %v1796 = vld [vmem:[%s11 + $0x44] sm:$0xf]
      %v1797 = vld [vmem:[%s11 + $0x48] sm:$0xf]
      %v1798 = vld [vmem:[%s11 + $0x4c] sm:$0xf]
      %v1799 = vld [vmem:[%s11 + $0x50] sm:$0xf]
      %v1800 = vld [vmem:[%s11 + $0x54] sm:$0xf]
      %v1801 = vld [vmem:[%s11 + $0x58] sm:$0xf]
      %v1802 = vld [vmem:[%s11 + $0x5c] sm:$0xf]
      %v1803 = vld [vmem:[%s11 + $0x60] sm:$0xf]
      %v1804 = vld [vmem:[%s11 + $0x64] sm:$0xf]
      %v1805 = vld [vmem:[%s11 + $0x68] sm:$0xf]
      %v1806 = vld [vmem:[%s11 + $0x6c] sm:$0xf]
      %v1807 = vld [vmem:[%s11 + $0x70] sm:$0xf]
      %v1808 = vld [vmem:[%s11 + $0x74] sm:$0xf]
      %v1809 = vld [vmem:[%s11 + $0x78] sm:$0xf]
      %v1810 = vld [vmem:[%s11 + $0x7c] sm:$0xf]
      %v1811 = vld [vmem:[%s12] sm:$0x1]
      %v1812 = vpack.c.bf16 %v1777, %v1777
      %v1813 = vpack.c.bf16 %v1778, %v1778
      %v1815 = vperm.slane %v1811, 0
      %v1849 = vunpack.c.l.b16 %v1779
      %v1850 = vunpack.c.l.b16 %v1780
      %v1851 = vunpack.c.l.b16 %v1781
      %v1852 = vunpack.c.l.b16 %v1782
      %v1853 = vunpack.c.l.b16 %v1783
      %v1854 = vunpack.c.l.b16 %v1784
      %v1855 = vunpack.c.l.b16 %v1785
      %v1856 = vunpack.c.l.b16 %v1786
      %v1857 = vunpack.c.l.b16 %v1787
      %v1858 = vunpack.c.l.b16 %v1788
      %v1859 = vunpack.c.l.b16 %v1789
      %v1860 = vunpack.c.l.b16 %v1790
      %v1861 = vunpack.c.l.b16 %v1791
      %v1862 = vunpack.c.l.b16 %v1792
      %v1863 = vunpack.c.l.b16 %v1793
      %v1864 = vunpack.c.l.b16 %v1794
      %v1865 = vunpack.c.l.b16 %v1795
      %v1866 = vunpack.c.l.b16 %v1796
      %v1867 = vunpack.c.l.b16 %v1797
      %v1868 = vunpack.c.l.b16 %v1798
      %v1869 = vunpack.c.l.b16 %v1799
      %v1870 = vunpack.c.l.b16 %v1800
      %v1871 = vunpack.c.l.b16 %v1801
      %v1872 = vunpack.c.l.b16 %v1802
      %v1873 = vunpack.c.l.b16 %v1803
      %v1874 = vunpack.c.l.b16 %v1804
      %v1875 = vunpack.c.l.b16 %v1805
      %v1876 = vunpack.c.l.b16 %v1806
      %v1877 = vunpack.c.l.b16 %v1807
      %v1878 = vunpack.c.l.b16 %v1808
      %v1879 = vunpack.c.l.b16 %v1809
      %v1880 = vunpack.c.l.b16 %v1810
      %v1881 = vpack.c.b16 %v1850, %v1849
      %v1882 = vpack.c.b16 %v1852, %v1851
      %v1883 = vpack.c.b16 %v1854, %v1853
      %v1884 = vpack.c.b16 %v1856, %v1855
      %v1885 = vpack.c.b16 %v1858, %v1857
      %v1886 = vpack.c.b16 %v1860, %v1859
      %v1887 = vpack.c.b16 %v1862, %v1861
      %v1888 = vpack.c.b16 %v1864, %v1863
      %v1889 = vpack.c.b16 %v1866, %v1865
      %v1890 = vpack.c.b16 %v1868, %v1867
      %v1891 = vpack.c.b16 %v1870, %v1869
      %v1892 = vpack.c.b16 %v1872, %v1871
      %v1893 = vpack.c.b16 %v1874, %v1873
      %v1894 = vpack.c.b16 %v1876, %v1875
      %v1895 = vpack.c.b16 %v1878, %v1877
      %v1896 = vpack.c.b16 %v1880, %v1879
      %1913 = vmatpush.bf16.msra.mxu0 %v1888
      %1914 = vmatpush.bf16.msra.mxu0 %v1887
      %1915 = vmatpush.bf16.msra.mxu0 %v1886
      %1916 = vmatpush.bf16.msra.mxu0 %v1885
      %1917 = vmatpush.bf16.msra.mxu0 %v1884
      %1918 = vmatpush.bf16.msra.mxu0 %v1883
      %1919 = vmatpush.bf16.msra.mxu0 %v1882
      %1920 = vmatpush.bf16.msra.mxu0 %v1881
      %1921 = vmatmul.bf16.gmra.mxu0 %v1812
      %v1922 = vpop.f32.mrf.mxu0
      %v1923 = vadd.f32 %v1815, %v1922
      %v1924 = vpop.f32.mrf.mxu0
      %1925 = vdwg.mxu0
      %1926 = vmatpush.bf16.msra.mxu0 %v1896
      %1927 = vmatpush.bf16.msra.mxu0 %v1895
      %1928 = vmatpush.bf16.msra.mxu0 %v1894
      %1929 = vmatpush.bf16.msra.mxu0 %v1893
      %1930 = vmatpush.bf16.msra.mxu0 %v1892
      %1931 = vmatpush.bf16.msra.mxu0 %v1891
      %1932 = vmatpush.bf16.msra.mxu0 %v1890
      %1933 = vmatpush.bf16.msra.mxu0 %v1889
      %1934 = vmatmul.bf16.gmra.mxu0 %v1813
      %v1935 = vpop.f32.mrf.mxu0
      %v1936 = vadd.f32 %v1923, %v1935
      %v1937 = vpop.f32.mrf.mxu0
      %1938 = vdwg.mxu0
      %vm1939 = vcmp.gt.f32.partialorder %v1936, 0.0
      %v1940 = vmul.f32 %v1936, 0.01
      %v1941 = vsel %vm1939, %v1936, %v1940
      %v1942 = vld [vmem:[%s13] sm:$0xf]
      %v1943 = vld [vmem:[%s13 + $0x4] sm:$0xf]
      %v1944 = vld [vmem:[%s13 + $0x8] sm:$0xf]
      %v1945 = vld [vmem:[%s13 + $0xc] sm:$0xf]
      %v1946 = vld [vmem:[%s13 + $0x10] sm:$0xf]
      %v1947 = vld [vmem:[%s13 + $0x14] sm:$0xf]
      %v1948 = vld [vmem:[%s13 + $0x18] sm:$0xf]
      %v1949 = vld [vmem:[%s13 + $0x1c] sm:$0xf]
      %v1950 = vld [vmem:[%s13 + $0x20] sm:$0xf]
      %v1951 = vld [vmem:[%s13 + $0x24] sm:$0xf]
      %v1952 = vld [vmem:[%s13 + $0x28] sm:$0xf]
      %v1953 = vld [vmem:[%s13 + $0x2c] sm:$0xf]
      %v1954 = vld [vmem:[%s13 + $0x30] sm:$0xf]
      %v1955 = vld [vmem:[%s13 + $0x34] sm:$0xf]
      %v1956 = vld [vmem:[%s13 + $0x38] sm:$0xf]
      %v1957 = vld [vmem:[%s13 + $0x3c] sm:$0xf]
      %v1958 = vld [vmem:[%s14] sm:$0x1]
      %v1959 = vpack.c.bf16 %v1941, %v1941
      %v1961 = vperm.slane %v1958, 0
      %v1979 = vunpack.c.l.b16 %v1942
      %v1980 = vunpack.c.l.b16 %v1943
      %v1981 = vunpack.c.l.b16 %v1944
      %v1982 = vunpack.c.l.b16 %v1945
      %v1983 = vunpack.c.l.b16 %v1946
      %v1984 = vunpack.c.l.b16 %v1947
      %v1985 = vunpack.c.l.b16 %v1948
      %v1986 = vunpack.c.l.b16 %v1949
      %v1987 = vunpack.c.l.b16 %v1950
      %v1988 = vunpack.c.l.b16 %v1951
      %v1989 = vunpack.c.l.b16 %v1952
      %v1990 = vunpack.c.l.b16 %v1953
      %v1991 = vunpack.c.l.b16 %v1954
      %v1992 = vunpack.c.l.b16 %v1955
      %v1993 = vunpack.c.l.b16 %v1956
      %v1994 = vunpack.c.l.b16 %v1957
      %v1995 = vpack.c.b16 %v1980, %v1979
      %v1996 = vpack.c.b16 %v1982, %v1981
      %v1997 = vpack.c.b16 %v1984, %v1983
      %v1998 = vpack.c.b16 %v1986, %v1985
      %v1999 = vpack.c.b16 %v1988, %v1987
      %v2000 = vpack.c.b16 %v1990, %v1989
      %v2001 = vpack.c.b16 %v1992, %v1991
      %v2002 = vpack.c.b16 %v1994, %v1993
      %2011 = vmatpush.bf16.msra.mxu0 %v2002
      %2012 = vmatpush.bf16.msra.mxu0 %v2001
      %2013 = vmatpush.bf16.msra.mxu0 %v2000
      %2014 = vmatpush.bf16.msra.mxu0 %v1999
      %2015 = vmatpush.bf16.msra.mxu0 %v1998
      %2016 = vmatpush.bf16.msra.mxu0 %v1997
      %2017 = vmatpush.bf16.msra.mxu0 %v1996
      %2018 = vmatpush.bf16.msra.mxu0 %v1995
      %2019 = vmatmul.bf16.gmra.mxu0 %v1959
      %v2020 = vpop.f32.mrf.mxu0
      %v2021 = vadd.f32 %v1961, %v2020
      %v2022 = vpop.f32.mrf.mxu0
      %2023 = vdwg.mxu0
      %vm2024 = vcmp.gt.f32.partialorder %v2021, 0.0
      %v2025 = vmul.f32 %v2021, 0.01
      %v2026 = vsel %vm2024, %v2021, %v2025
      %v2027 = vld [vmem:[%s15] sm:$0xf]
      %v2028 = vld [vmem:[%s15 + $0x4] sm:$0xf]
      %v2029 = vld [vmem:[%s15 + $0x8] sm:$0xf]
      %v2030 = vld [vmem:[%s15 + $0xc] sm:$0xf]
      %v2031 = vld [vmem:[%s15 + $0x10] sm:$0xf]
      %v2032 = vld [vmem:[%s15 + $0x14] sm:$0xf]
      %v2033 = vld [vmem:[%s15 + $0x18] sm:$0xf]
      %v2034 = vld [vmem:[%s15 + $0x1c] sm:$0xf]
      %v2035 = vld [vmem:[%s16] sm:$0x1]
      %v2036 = vpack.c.bf16 %v2026, %v2026
      %v2038 = vperm.slane %v2035, 0
      %v2048 = vunpack.c.l.b16 %v2027
      %v2049 = vunpack.c.l.b16 %v2028
      %v2050 = vunpack.c.l.b16 %v2029
      %v2051 = vunpack.c.l.b16 %v2030
      %v2052 = vunpack.c.l.b16 %v2031
      %v2053 = vunpack.c.l.b16 %v2032
      %v2054 = vunpack.c.l.b16 %v2033
      %v2055 = vunpack.c.l.b16 %v2034
      %v2056 = vpack.c.b16 %v2049, %v2048
      %v2057 = vpack.c.b16 %v2051, %v2050
      %v2058 = vpack.c.b16 %v2053, %v2052
      %v2059 = vpack.c.b16 %v2055, %v2054
      %v2065 = vsel %vm614, %v2036, 0
      %2067 = vmatpush.bf16.msra.mxu0 0
      %2068 = vmatpush.bf16.msra.mxu0 0
      %2069 = vmatpush.bf16.msra.mxu0 0
      %2070 = vmatpush.bf16.msra.mxu0 0
      %2071 = vmatpush.bf16.msra.mxu0 %v2059
      %2072 = vmatpush.bf16.msra.mxu0 %v2058
      %2073 = vmatpush.bf16.msra.mxu0 %v2057
      %2074 = vmatpush.bf16.msra.mxu0 %v2056
      %2075 = vmatmul.bf16.gmra.mxu0 %v2065
      %v2076 = vpop.f32.mrf.mxu0
      %v2077 = vadd.f32 %v2038, %v2076
      %v2078 = vpop.f32.mrf.mxu0
      %2079 = vdwg.mxu0
      %vm2080 = vcmask 31744
      %2081 = vst.msk [vmem:[%s543] sm:$0xff] %vm2080, %v2077
      %p2082 = scmp.lt.s32.totalorder %s28, 1
      %s2083 = scalar_select %p2082, %s28, 1
      %s2084 = smul.addr %s2083, 8
      %s2085 = scalar_lea.vmem %s17, %s2084
      // Predicated region
      $region89: #{adnn_forward.1} parent=87 // pred_check
        %p2086 = pneg %p408
      $region90: #{adnn_forward.1} parent=87 // pred_check_branch
        %2088 = sbr.rel (%p2086) target = $region92
      $region91: #{adnn_forward.1} parent=87 // pred_region
        _
      $region92: #{adnn_forward.1} parent=87 // pred_fallthru
        _
    $region88: #{adnn_forward.1} parent=5 // pred_fallthru
      _
    %p2089 = scmp.le.s32.totalorder 2, %s23
    // Predicated region
    $region93: #{adnn_forward.1} parent=5 // pred_check
      %p2090 = pneg %p2089
    $region94: #{adnn_forward.1} parent=5 // pred_check_branch
      %2092 = sbr.rel (%p2090) target = $region96
    $region95: #{adnn_forward.1} parent=5 // pred_region
      %s2093 = ssub.s32 %s23, 2
      // Predicated region
      $region97: #{adnn_forward.1} parent=95 // pred_check
        %p2094 = pneg %p414
      $region98: #{adnn_forward.1} parent=95 // pred_check_branch
        %2096 = sbr.rel (%p2094) target = $region100
      $region99: #{adnn_forward.1} parent=95 // pred_region
        %p2097 = scmp.lt.s32.totalorder %s29, 1
        %s2098 = scalar_select %p2097, %s29, 1
        %s2099 = smul.addr %s2098, 8
        %s2100 = scalar_lea.vmem %s17, %s2099
      $region100: #{adnn_forward.1} parent=95 // pred_fallthru
        _
    $region96: #{adnn_forward.1} parent=5 // pred_fallthru
      _
  $region6: #{adnn_forward.1} parent=0 // loop_footer
    %s27 = sadd.s32 1, %s23
  $region7: #{adnn_forward.1} parent=0 // loop_footer_branch
    %22 = sbr.rel target = $region3
  $region8: #{adnn_forward.1} parent=0 // loop_exit
    _

</llo_original>
